<compile_context>
chip_gen: v7x
topology: tpu7x:2x2x1
jax: 0.10.0
libtpu: 0.0.40
codegen_flags: <defaults>
</compile_context>

<pallas_src>
import functools

import jax
import jax.numpy as jnp
import numpy as np
from jax.experimental import pallas as pl
from jax.experimental.pallas import tpu as pltpu


def _round_up(x, m):
    return ((x + m - 1) // m) * m


def _cdiv(a, b):
    return -(-a // b)


# ----------------------------- Pallas kernel -------------------------------
def _critic_kernel(z_ref, s_ref, w1s_ref, w1z_ref, b1_ref, w2_ref, b2_ref,
                   w3_ref, b3_ref, o_ref, h1_ref, h2_ref):
    strategy_num = w1z_ref.shape[0]

    # Layer 1 (state part): s @ W1_s on the MXU, bf16 in / f32 accumulate.
    h = jnp.dot(s_ref[...], w1s_ref[...], preferred_element_type=jnp.float32)

    # Layer 1 (strategy part): one_hot(z) @ W1_z as a VPU select-accumulate.
    # strategy_num is tiny (4), fully unrolled; runs on VALU slots while the
    # MXU pass above is in flight.
    z = z_ref[...]                                   # (tb, 1) int32
    w1z = w1z_ref[...]                               # (strategy_num, hidden) f32
    for k in range(strategy_num):
        h = h + jnp.where(z == k, w1z[k:k + 1, :], 0.0)

    # f32 bias + ReLU epilogue, stored as bf16 (layer 2 consumes bf16 anyway).
    h1_ref[...] = jnp.maximum(h + b1_ref[...], 0.0).astype(jnp.bfloat16)

    # Layer 2: Linear + ReLU.
    h = jnp.dot(h1_ref[...], w2_ref[...], preferred_element_type=jnp.float32)
    h2_ref[...] = jnp.maximum(h + b2_ref[...], 0.0).astype(jnp.bfloat16)

    # Output layer: Linear (Q-values, no activation / no softmax).
    out = jnp.dot(h2_ref[...], w3_ref[...], preferred_element_type=jnp.float32)
    o_ref[...] = out + b3_ref[...]


# ------------------------- plain-JAX forward (fast path / reference) --------
def _ref_forward(s, z, params):
    """Matches the kernel math exactly (bf16 matmul inputs, f32 accumulation)."""
    w1s, w1z, b1, w2, b2, w3, b3 = params
    batch = s.shape[0]
    s_flat = jnp.reshape(s, (batch, -1)).astype(jnp.bfloat16)
    h = jnp.dot(s_flat, w1s, preferred_element_type=jnp.float32)
    h = h + jnp.take(w1z, jnp.asarray(z, jnp.int32), axis=0)   # == one_hot(z) @ W1_z
    h = jnp.maximum(h + b1, 0.0).astype(jnp.bfloat16)
    h = jnp.maximum(jnp.dot(h, w2, preferred_element_type=jnp.float32) + b2,
                    0.0).astype(jnp.bfloat16)
    return jnp.dot(h, w3, preferred_element_type=jnp.float32) + b3


# ------------------------------- wrapper ------------------------------------
def conditional_critic_forward(s, z, params, *, block_batch=1024, min_grid=2,
                               small_batch_threshold=256, use_pallas=None):
    """Forward pass of ConditionalCritic (layer_num=2) using a Pallas kernel."""
    batch = s.shape[0]

    # Small-batch fast path: at tiny batch the kernel is pure launch overhead.
    if use_pallas is None:
        use_pallas = batch >= small_batch_threshold
    if not use_pallas:
        return _ref_forward(s, z, params)

    w1s, w1z, b1, w2, b2, w3, b3 = params
    k_s = w1s.shape[0]
    strategy_num = w1z.shape[0]
    hidden = w1s.shape[1]
    out_dim = w3.shape[1]

    # Stream s as bf16 (halves HBM->VMEM DMA bytes; removes in-kernel cast).
    s_flat = jnp.reshape(s, (batch, -1)).astype(jnp.bfloat16)
    z_i = jnp.reshape(z, (batch, 1)).astype(jnp.int32)

    # Tile selection: >= min_grid steps (v7x megacore), multiple of 16 (bf16
    # sublane packing), capped at block_batch, and sized to minimize padding.
    block_batch = max(16, _round_up(block_batch, 16))
    grid_target = max(min_grid, _cdiv(batch, block_batch))
    tb = min(_round_up(_cdiv(batch, grid_target), 16), block_batch)
    padded = _round_up(batch, tb)
    if padded != batch:
        s_flat = jnp.pad(s_flat, ((0, padded - batch), (0, 0)))
        z_i = jnp.pad(z_i, ((0, padded - batch), (0, 0)))

    grid = (padded // tb,)

    flops = 2 * padded * (k_s * hidden + hidden * hidden + hidden * out_dim) \
        + padded * strategy_num * hidden
    weight_bytes = sum(int(np.prod(p.shape)) * p.dtype.itemsize for p in params)
    bytes_accessed = padded * (k_s * 2 + 4 + out_dim * 4) + weight_bytes

    out = pl.pallas_call(
        _critic_kernel,
        out_shape=jax.ShapeDtypeStruct((padded, out_dim), jnp.float32),
        grid=grid,
        in_specs=[
            pl.BlockSpec((tb, 1), lambda i: (i, 0)),                 # z
            pl.BlockSpec((tb, k_s), lambda i: (i, 0)),               # s_flat (bf16)
            pl.BlockSpec((k_s, hidden), lambda i: (0, 0)),           # W1_s (pinned)
            pl.BlockSpec((strategy_num, hidden), lambda i: (0, 0)),  # W1_z (pinned, f32)
            pl.BlockSpec((1, hidden), lambda i: (0, 0)),             # b1
            pl.BlockSpec((hidden, hidden), lambda i: (0, 0)),        # W2
            pl.BlockSpec((1, hidden), lambda i: (0, 0)),             # b2
            pl.BlockSpec((hidden, out_dim), lambda i: (0, 0)),       # W3
            pl.BlockSpec((1, out_dim), lambda i: (0, 0)),            # b3
        ],
        out_specs=pl.BlockSpec((tb, out_dim), lambda i: (i, 0)),
        scratch_shapes=[pltpu.VMEM((tb, hidden), jnp.bfloat16),      # h1
                        pltpu.VMEM((tb, hidden), jnp.bfloat16)],     # h2
        compiler_params=pltpu.CompilerParams(
            dimension_semantics=("parallel",)),
        cost_estimate=pl.CostEstimate(
            flops=flops, transcendentals=0, bytes_accessed=bytes_accessed),
    )(z_i, s_flat, w1s, w1z, b1, w2, b2, w3, b3)

    if padded != batch:
        out = out[:batch]
    return out


# ------------------------- deterministic init ------------------------------
def _orthogonal(key, rows, cols):
    """Mimic torch.nn.init.orthogonal_ for a (rows, cols) matrix."""
    big, small = max(rows, cols), min(rows, cols)
    m = jax.random.normal(key, (big, small), dtype=jnp.float32)
    q, r = jnp.linalg.qr(m)
    d = jnp.sign(jnp.diagonal(r))
    d = jnp.where(d == 0, 1.0, d)
    q = q * d[None, :]
    if rows < cols:
        q = q.T
    return q


def init_params(key, k_s, strategy_num, hidden, out_dim,
                weight_dtype=jnp.bfloat16):
    """Params mirror torch Linear layers; weights stored transposed (in, out).

    W1 is split row-wise into the state part (bf16, MXU) and the strategy part
    (f32, VPU select-accumulate).  Biases are f32.
    """
    k1, k2, k3 = jax.random.split(key, 3)
    in_dim = k_s + strategy_num
    w1 = _orthogonal(k1, hidden, in_dim).T          # (in_dim, hidden)
    w1s = w1[:k_s].astype(weight_dtype)
    w1z = w1[k_s:].astype(jnp.float32)
    w2 = _orthogonal(k2, hidden, hidden).T.astype(weight_dtype)
    w3 = _orthogonal(k3, out_dim, hidden).T.astype(weight_dtype)
    b1 = jnp.zeros((1, hidden), jnp.float32)
    b2 = jnp.zeros((1, hidden), jnp.float32)
    b3 = jnp.zeros((1, out_dim), jnp.float32)
    return (w1s, w1z, b1, w2, b2, w3, b3)


if __name__ == "__main__":
    # Module hyperparameters (consistent with ConditionalCritic.__init__).
    layer_num = 2                  # kernel is specialized to layer_num=2
    state_shape = (4, 4)           # prod = 16
    strategy_num = 4
    action_shape = (4,)            # prod = 4
    hidden_units = 128
    batch = 200                    # awkward size: exercises tiling + padding (grid=2)

    k_s = int(np.prod(state_shape))
    out_dim = int(np.prod(action_shape))

    key = jax.random.PRNGKey(0)
    ks, kz, kp = jax.random.split(key, 3)

    s = jax.random.normal(ks, (batch,) + state_shape, dtype=jnp.float32)
    z = jax.random.randint(kz, (batch,), 0, strategy_num)

    params = init_params(kp, k_s, strategy_num, hidden_units, out_dim)

    # Force the Pallas path so the kernel itself is exercised even at this size.
    fwd = jax.jit(functools.partial(conditional_critic_forward,
                                    block_batch=1024, use_pallas=True))
    q = fwd(s, z, params)
    jax.block_until_ready(q)

    ref = _ref_forward(s, z, params)
    np.testing.assert_allclose(np.asarray(q), np.asarray(ref),
                               rtol=2e-3, atol=2e-3)

    assert q.shape == (batch, out_dim)
    print("KERNEL_OK")
</pallas_src>

<mosaic_0001>
module attributes {stable_mosaic.version = 11 : i64} {
  func.func @_critic_kernel(%arg0: i32, %arg1: memref<112x1xi32, #tpu.memory_space<vmem>>, %arg2: memref<112x16xbf16, #tpu.memory_space<vmem>>, %arg3: memref<16x128xbf16, #tpu.memory_space<vmem>>, %arg4: memref<4x128xf32, #tpu.memory_space<vmem>>, %arg5: memref<1x128xf32, #tpu.memory_space<vmem>>, %arg6: memref<128x128xbf16, #tpu.memory_space<vmem>>, %arg7: memref<1x128xf32, #tpu.memory_space<vmem>>, %arg8: memref<128x4xbf16, #tpu.memory_space<vmem>>, %arg9: memref<1x4xf32, #tpu.memory_space<vmem>>, %arg10: memref<112x4xf32, #tpu.memory_space<vmem>>, %arg11: memref<112x128xbf16, #tpu.memory_space<vmem>>, %arg12: memref<112x128xbf16, #tpu.memory_space<vmem>>) attributes {dimension_semantics = [#tpu.dimension_semantics<parallel>], iteration_bounds = array<i64: 2>, scalar_prefetch = 0 : i64, scratch_operands = 2 : i64, tpu.core_type = #tpu.core_type<tc>, window_params = [{transform_indices = @transform_0, window_bounds = array<i64: 112, 1>}, {transform_indices = @transform_1, window_bounds = array<i64: 112, 16>}, {pipeline_mode = #tpu.pipeline_mode<synchronous>, transform_indices = @transform_2, window_bounds = array<i64: 16, 128>}, {pipeline_mode = #tpu.pipeline_mode<synchronous>, transform_indices = @transform_3, window_bounds = array<i64: 4, 128>}, {pipeline_mode = #tpu.pipeline_mode<synchronous>, transform_indices = @transform_4, window_bounds = array<i64: 1, 128>}, {pipeline_mode = #tpu.pipeline_mode<synchronous>, transform_indices = @transform_5, window_bounds = array<i64: 128, 128>}, {pipeline_mode = #tpu.pipeline_mode<synchronous>, transform_indices = @transform_6, window_bounds = array<i64: 1, 128>}, {pipeline_mode = #tpu.pipeline_mode<synchronous>, transform_indices = @transform_7, window_bounds = array<i64: 128, 4>}, {pipeline_mode = #tpu.pipeline_mode<synchronous>, transform_indices = @transform_8, window_bounds = array<i64: 1, 4>}, {transform_indices = @transform_9, window_bounds = array<i64: 112, 4>}]} {
    %c0 = arith.constant 0 : index
    %c0_0 = arith.constant 0 : index
    %0 = vector.load %arg2[%c0, %c0_0] : memref<112x16xbf16, #tpu.memory_space<vmem>>, vector<112x16xbf16>
    %c0_1 = arith.constant 0 : index
    %c0_2 = arith.constant 0 : index
    %1 = vector.load %arg3[%c0_1, %c0_2] : memref<16x128xbf16, #tpu.memory_space<vmem>>, vector<16x128xbf16>
    %cst = arith.constant dense<0.000000e+00> : vector<112x128xf32>
    %2 = tpu.matmul %0, %1, %cst {dimension_numbers = #tpu.dot_dimension_numbers<[1], [0], [0], [1], [0, 0, 1, 1], [], []>} : vector<112x16xbf16>, vector<16x128xbf16>, vector<112x128xf32> -> vector<112x128xf32>
    %c0_3 = arith.constant 0 : index
    %c0_4 = arith.constant 0 : index
    %3 = vector.load %arg1[%c0_3, %c0_4] : memref<112x1xi32, #tpu.memory_space<vmem>>, vector<112x1xi32>
    %c0_5 = arith.constant 0 : index
    %c0_6 = arith.constant 0 : index
    %4 = vector.load %arg4[%c0_5, %c0_6] : memref<4x128xf32, #tpu.memory_space<vmem>>, vector<4x128xf32>
    %c0_i32 = arith.constant 0 : i32
    %5 = vector.broadcast %c0_i32 : i32 to vector<112x1xi32>
    %6 = arith.cmpi eq, %3, %5 : vector<112x1xi32>
    %7 = vector.extract_strided_slice %4 {offsets = [0, 0], sizes = [1, 128], strides = [1, 1]} : vector<4x128xf32> to vector<1x128xf32>
    %cst_7 = arith.constant 0.000000e+00 : f32
    %8 = vector.shape_cast %6 : vector<112x1xi1> to vector<112x1xi1>
    %9 = vector.broadcast %8 : vector<112x1xi1> to vector<112x128xi1>
    %10 = vector.shape_cast %7 : vector<1x128xf32> to vector<1x128xf32>
    %11 = vector.broadcast %10 : vector<1x128xf32> to vector<112x128xf32>
    %12 = vector.broadcast %cst_7 : f32 to vector<112x128xf32>
    %13 = arith.select %9, %11, %12 : vector<112x128xi1>, vector<112x128xf32>
    %14 = arith.addf %2, %13 : vector<112x128xf32>
    %c1_i32 = arith.constant 1 : i32
    %15 = vector.broadcast %c1_i32 : i32 to vector<112x1xi32>
    %16 = arith.cmpi eq, %3, %15 : vector<112x1xi32>
    %17 = vector.extract_strided_slice %4 {offsets = [1, 0], sizes = [1, 128], strides = [1, 1]} : vector<4x128xf32> to vector<1x128xf32>
    %cst_8 = arith.constant 0.000000e+00 : f32
    %18 = vector.shape_cast %16 : vector<112x1xi1> to vector<112x1xi1>
    %19 = vector.broadcast %18 : vector<112x1xi1> to vector<112x128xi1>
    %20 = vector.shape_cast %17 : vector<1x128xf32> to vector<1x128xf32>
    %21 = vector.broadcast %20 : vector<1x128xf32> to vector<112x128xf32>
    %22 = vector.broadcast %cst_8 : f32 to vector<112x128xf32>
    %23 = arith.select %19, %21, %22 : vector<112x128xi1>, vector<112x128xf32>
    %24 = arith.addf %14, %23 : vector<112x128xf32>
    %c2_i32 = arith.constant 2 : i32
    %25 = vector.broadcast %c2_i32 : i32 to vector<112x1xi32>
    %26 = arith.cmpi eq, %3, %25 : vector<112x1xi32>
    %27 = vector.extract_strided_slice %4 {offsets = [2, 0], sizes = [1, 128], strides = [1, 1]} : vector<4x128xf32> to vector<1x128xf32>
    %cst_9 = arith.constant 0.000000e+00 : f32
    %28 = vector.shape_cast %26 : vector<112x1xi1> to vector<112x1xi1>
    %29 = vector.broadcast %28 : vector<112x1xi1> to vector<112x128xi1>
    %30 = vector.shape_cast %27 : vector<1x128xf32> to vector<1x128xf32>
    %31 = vector.broadcast %30 : vector<1x128xf32> to vector<112x128xf32>
    %32 = vector.broadcast %cst_9 : f32 to vector<112x128xf32>
    %33 = arith.select %29, %31, %32 : vector<112x128xi1>, vector<112x128xf32>
    %34 = arith.addf %24, %33 : vector<112x128xf32>
    %c3_i32 = arith.constant 3 : i32
    %35 = vector.broadcast %c3_i32 : i32 to vector<112x1xi32>
    %36 = arith.cmpi eq, %3, %35 : vector<112x1xi32>
    %37 = vector.extract_strided_slice %4 {offsets = [3, 0], sizes = [1, 128], strides = [1, 1]} : vector<4x128xf32> to vector<1x128xf32>
    %cst_10 = arith.constant 0.000000e+00 : f32
    %38 = vector.shape_cast %36 : vector<112x1xi1> to vector<112x1xi1>
    %39 = vector.broadcast %38 : vector<112x1xi1> to vector<112x128xi1>
    %40 = vector.shape_cast %37 : vector<1x128xf32> to vector<1x128xf32>
    %41 = vector.broadcast %40 : vector<1x128xf32> to vector<112x128xf32>
    %42 = vector.broadcast %cst_10 : f32 to vector<112x128xf32>
    %43 = arith.select %39, %41, %42 : vector<112x128xi1>, vector<112x128xf32>
    %44 = arith.addf %34, %43 : vector<112x128xf32>
    %c0_11 = arith.constant 0 : index
    %c0_12 = arith.constant 0 : index
    %45 = vector.load %arg5[%c0_11, %c0_12] : memref<1x128xf32, #tpu.memory_space<vmem>>, vector<1x128xf32>
    %46 = vector.broadcast %45 : vector<1x128xf32> to vector<112x128xf32>
    %47 = arith.addf %44, %46 : vector<112x128xf32>
    %cst_13 = arith.constant 0.000000e+00 : f32
    %48 = vector.broadcast %cst_13 : f32 to vector<112x128xf32>
    %49 = arith.maximumf %47, %48 : vector<112x128xf32>
    %50 = arith.truncf %49 : vector<112x128xf32> to vector<112x128xbf16>
    %c0_14 = arith.constant 0 : index
    %c0_15 = arith.constant 0 : index
    %51 = vector.load %arg11[%c0_14, %c0_15] : memref<112x128xbf16, #tpu.memory_space<vmem>>, vector<112x128xbf16>
    tpu.vector_store %arg11[%c0_14, %c0_15], %50 {strides = array<i32>} : memref<112x128xbf16, #tpu.memory_space<vmem>>, vector<112x128xbf16>,
    %c0_16 = arith.constant 0 : index
    %c0_17 = arith.constant 0 : index
    %52 = vector.load %arg11[%c0_16, %c0_17] : memref<112x128xbf16, #tpu.memory_space<vmem>>, vector<112x128xbf16>
    %c0_18 = arith.constant 0 : index
    %c0_19 = arith.constant 0 : index
    %53 = vector.load %arg6[%c0_18, %c0_19] : memref<128x128xbf16, #tpu.memory_space<vmem>>, vector<128x128xbf16>
    %cst_20 = arith.constant dense<0.000000e+00> : vector<112x128xf32>
    %54 = tpu.matmul %52, %53, %cst_20 {dimension_numbers = #tpu.dot_dimension_numbers<[1], [0], [0], [1], [0, 0, 1, 1], [], []>} : vector<112x128xbf16>, vector<128x128xbf16>, vector<112x128xf32> -> vector<112x128xf32>
    %c0_21 = arith.constant 0 : index
    %c0_22 = arith.constant 0 : index
    %55 = vector.load %arg7[%c0_21, %c0_22] : memref<1x128xf32, #tpu.memory_space<vmem>>, vector<1x128xf32>
    %56 = vector.broadcast %55 : vector<1x128xf32> to vector<112x128xf32>
    %57 = arith.addf %54, %56 : vector<112x128xf32>
    %cst_23 = arith.constant 0.000000e+00 : f32
    %58 = vector.broadcast %cst_23 : f32 to vector<112x128xf32>
    %59 = arith.maximumf %57, %58 : vector<112x128xf32>
    %60 = arith.truncf %59 : vector<112x128xf32> to vector<112x128xbf16>
    %c0_24 = arith.constant 0 : index
    %c0_25 = arith.constant 0 : index
    %61 = vector.load %arg12[%c0_24, %c0_25] : memref<112x128xbf16, #tpu.memory_space<vmem>>, vector<112x128xbf16>
    tpu.vector_store %arg12[%c0_24, %c0_25], %60 {strides = array<i32>} : memref<112x128xbf16, #tpu.memory_space<vmem>>, vector<112x128xbf16>,
    %c0_26 = arith.constant 0 : index
    %c0_27 = arith.constant 0 : index
    %62 = vector.load %arg12[%c0_26, %c0_27] : memref<112x128xbf16, #tpu.memory_space<vmem>>, vector<112x128xbf16>
    %c0_28 = arith.constant 0 : index
    %c0_29 = arith.constant 0 : index
    %63 = vector.load %arg8[%c0_28, %c0_29] : memref<128x4xbf16, #tpu.memory_space<vmem>>, vector<128x4xbf16>
    %cst_30 = arith.constant dense<0.000000e+00> : vector<112x4xf32>
    %64 = tpu.matmul %62, %63, %cst_30 {dimension_numbers = #tpu.dot_dimension_numbers<[1], [0], [0], [1], [0, 0, 1, 1], [], []>} : vector<112x128xbf16>, vector<128x4xbf16>, vector<112x4xf32> -> vector<112x4xf32>
    %c0_31 = arith.constant 0 : index
    %c0_32 = arith.constant 0 : index
    %65 = vector.load %arg9[%c0_31, %c0_32] : memref<1x4xf32, #tpu.memory_space<vmem>>, vector<1x4xf32>
    %66 = vector.broadcast %65 : vector<1x4xf32> to vector<112x4xf32>
    %67 = arith.addf %64, %66 : vector<112x4xf32>
    %c0_33 = arith.constant 0 : index
    %c0_34 = arith.constant 0 : index
    %68 = vector.load %arg10[%c0_33, %c0_34] : memref<112x4xf32, #tpu.memory_space<vmem>>, vector<112x4xf32>
    tpu.vector_store %arg10[%c0_33, %c0_34], %67 {strides = array<i32>} : memref<112x4xf32, #tpu.memory_space<vmem>>, vector<112x4xf32>,
    return
  }
  func.func @transform_0(%arg0: i32) -> (i32, i32) {
    %c0_i32 = arith.constant 0 : i32
    %c0_i32_0 = arith.constant 0 : i32
    return %arg0, %c0_i32 : i32, i32
  }
  func.func @transform_1(%arg0: i32) -> (i32, i32) {
    %c0_i32 = arith.constant 0 : i32
    %c0_i32_0 = arith.constant 0 : i32
    return %arg0, %c0_i32 : i32, i32
  }
  func.func @transform_2(%arg0: i32) -> (i32, i32) {
    %c0_i32 = arith.constant 0 : i32
    %c0_i32_0 = arith.constant 0 : i32
    %c0_i32_1 = arith.constant 0 : i32
    return %c0_i32, %c0_i32_0 : i32, i32
  }
  func.func @transform_3(%arg0: i32) -> (i32, i32) {
    %c0_i32 = arith.constant 0 : i32
    %c0_i32_0 = arith.constant 0 : i32
    %c0_i32_1 = arith.constant 0 : i32
    return %c0_i32, %c0_i32_0 : i32, i32
  }
  func.func @transform_4(%arg0: i32) -> (i32, i32) {
    %c0_i32 = arith.constant 0 : i32
    %c0_i32_0 = arith.constant 0 : i32
    %c0_i32_1 = arith.constant 0 : i32
    return %c0_i32, %c0_i32_0 : i32, i32
  }
  func.func @transform_5(%arg0: i32) -> (i32, i32) {
    %c0_i32 = arith.constant 0 : i32
    %c0_i32_0 = arith.constant 0 : i32
    %c0_i32_1 = arith.constant 0 : i32
    return %c0_i32, %c0_i32_0 : i32, i32
  }
  func.func @transform_6(%arg0: i32) -> (i32, i32) {
    %c0_i32 = arith.constant 0 : i32
    %c0_i32_0 = arith.constant 0 : i32
    %c0_i32_1 = arith.constant 0 : i32
    return %c0_i32, %c0_i32_0 : i32, i32
  }
  func.func @transform_7(%arg0: i32) -> (i32, i32) {
    %c0_i32 = arith.constant 0 : i32
    %c0_i32_0 = arith.constant 0 : i32
    %c0_i32_1 = arith.constant 0 : i32
    return %c0_i32, %c0_i32_0 : i32, i32
  }
  func.func @transform_8(%arg0: i32) -> (i32, i32) {
    %c0_i32 = arith.constant 0 : i32
    %c0_i32_0 = arith.constant 0 : i32
    %c0_i32_1 = arith.constant 0 : i32
    return %c0_i32, %c0_i32_0 : i32, i32
  }
  func.func @transform_9(%arg0: i32) -> (i32, i32) {
    %c0_i32 = arith.constant 0 : i32
    %c0_i32_0 = arith.constant 0 : i32
    return %arg0, %c0_i32 : i32, i32
  }
}

</mosaic_0001>

<llo_original>
// kernel: conditional_critic_forward.1
$region0: #{conditional_critic_forward.1}
  #allocation0 [shape = 'u32[]', space=smem, size = 0x4, offset = 0x4, fixed_abs, tag = 'smem constant byte address 0x4 - core index']
  #allocation1 [shape = 'u32[144,128]{1,0:T(1,128)}', space=vmem, size = 0x12000, scoped, tag = 'internal scratch']
  #allocation2 [shape = 'bf16[112,128]{1,0:T(16,128)(2,1)}', space=vmem, size = 0x7000, scoped, tag = 'scratch operand']
  #allocation3 [shape = 'bf16[112,128]{1,0:T(16,128)(2,1)}', space=vmem, size = 0x7000, scoped, tag = 'scratch operand']
  %s0 = inlined_call_operand.vmem [shape: s32[224,1], index: 0, kind: input, shape index: {}]
  %s1 = inlined_call_operand.vmem [shape: bf16[224,16], index: 1, kind: input, shape index: {}]
  %s2 = inlined_call_operand.vmem [shape: bf16[16,128], index: 2, kind: input, shape index: {}]
  %s3 = inlined_call_operand.vmem [shape: f32[4,128], index: 3, kind: input, shape index: {}]
  %s4 = inlined_call_operand.vmem [shape: f32[1,128], index: 4, kind: input, shape index: {}]
  %s5 = inlined_call_operand.vmem [shape: bf16[128,128], index: 5, kind: input, shape index: {}]
  %s6 = inlined_call_operand.vmem [shape: f32[1,128], index: 6, kind: input, shape index: {}]
  %s7 = inlined_call_operand.vmem [shape: bf16[128,4], index: 7, kind: input, shape index: {}]
  %s8 = inlined_call_operand.vmem [shape: f32[1,4], index: 8, kind: input, shape index: {}]
  %s9 = inlined_call_operand.vmem [shape: f32[224,4], index: 9, kind: output, shape index: {}]
  %s10 = sld [smem:[#allocation0]]
  $region69: #{conditional_critic_forward.1} parent=0
    _
  %s12 = ssub.s32 1, %s10
  %s13 = scalar_select 0, %s12, %s10
  loop: start=0, step=1, limit=4
  $region2: #{conditional_critic_forward.1} parent=0 // loop_pre_header
    _
  $region3: #{conditional_critic_forward.1} parent=0 // loop_header
    %s15 = sphi 0, %s19
    %p16 = scmp.ge.s32.totalorder %s15, 4
    %s25 = sphi 0, %s27
    %s28 = sphi 0, %s25
    %s29 = sphi 0, %s28
    %s45 = sphi 0, %s29
    %s51 = sphi 0, %s53
    %s54 = sphi 0, %s51
    %s55 = sphi 0, %s54
    %s71 = sphi 0, %s55
    %s75 = sphi 0, %s75
    %s77 = sphi 0, %s75
    %s78 = sphi 0, %s77
    %s92 = sphi 0, %s78
    %s96 = sphi 0, %s96
    %s98 = sphi 0, %s96
    %s99 = sphi 0, %s98
    %s113 = sphi 0, %s99
    %s117 = sphi 0, %s117
    %s119 = sphi 0, %s117
    %s120 = sphi 0, %s119
    %s134 = sphi 0, %s120
    %s138 = sphi 0, %s138
    %s140 = sphi 0, %s138
    %s141 = sphi 0, %s140
    %s155 = sphi 0, %s141
    %s159 = sphi 0, %s159
    %s161 = sphi 0, %s159
    %s162 = sphi 0, %s161
    %s176 = sphi 0, %s162
    %s180 = sphi 0, %s180
    %s182 = sphi 0, %s180
    %s183 = sphi 0, %s182
    %s197 = sphi 0, %s183
    %s201 = sphi 0, %s201
    %s203 = sphi 0, %s201
    %s204 = sphi 0, %s203
    %s218 = sphi 0, %s204
    %s224 = sphi 0, %s226
    %s227 = sphi 0, %s224
    %s228 = sphi 0, %s227
    %s244 = sphi 0, %s228
  $region4: #{conditional_critic_forward.1} parent=0 // loop_header_branch
    %18 = sbr.rel (%p16) target = $region8
  $region5: #{conditional_critic_forward.1} parent=0 // loop_body
    %s20 = ssub.s32 %s15, 1
    %s21 = ssub.s32 %s15, 2
    %s22 = sadd.s32 %s15, 1
    %s23 = ssub.s32 %s15, %s22
    %p24 = scmp.eq.s32.totalorder %s23, 0
    %s26 = sadd.s32 %s25, 1
    %s27 = scalar_select %p24, %s25, %s26
    %p30 = pneg %p24
    %p31 = scmp.eq.s32.totalorder %s15, 1
    %p32 = por %p30, %p31
    %p33 = scmp.ne.s32.totalorder %s25, %s28
    %p34 = scmp.eq.s32.totalorder %s15, 0
    %p35 = por %p33, %p34
    %p36 = scmp.ne.s32.totalorder %s25, %s28
    %p37 = scmp.eq.s32.totalorder %s20, 1
    %p38 = por %p36, %p37
    %p39 = scmp.ne.s32.totalorder %s28, %s29
    %p40 = scmp.eq.s32.totalorder %s20, 0
    %p41 = por %p39, %p40
    %p42 = scmp.ne.s32.totalorder %s28, %s29
    %p43 = scmp.eq.s32.totalorder %s21, 1
    %p44 = por %p42, %p43
    %p46 = scmp.ne.s32.totalorder %s29, %s45
    %p47 = scmp.eq.s32.totalorder %s21, 0
    %p48 = por %p46, %p47
    %s49 = ssub.s32 %s15, %s22
    %p50 = scmp.eq.s32.totalorder %s49, 0
    %s52 = sadd.s32 %s51, 1
    %s53 = scalar_select %p50, %s51, %s52
    %p56 = pneg %p50
    %p57 = scmp.eq.s32.totalorder %s15, 1
    %p58 = por %p56, %p57
    %p59 = scmp.ne.s32.totalorder %s51, %s54
    %p60 = scmp.eq.s32.totalorder %s15, 0
    %p61 = por %p59, %p60
    %p62 = scmp.ne.s32.totalorder %s51, %s54
    %p63 = scmp.eq.s32.totalorder %s20, 1
    %p64 = por %p62, %p63
    %p65 = scmp.ne.s32.totalorder %s54, %s55
    %p66 = scmp.eq.s32.totalorder %s20, 0
    %p67 = por %p65, %p66
    %p68 = scmp.ne.s32.totalorder %s54, %s55
    %p69 = scmp.eq.s32.totalorder %s21, 1
    %p70 = por %p68, %p69
    %p72 = scmp.ne.s32.totalorder %s55, %s71
    %p73 = scmp.eq.s32.totalorder %s21, 0
    %p74 = por %p72, %p73
    %s76 = sadd.s32 %s75, 1
    %p79 = scmp.eq.s32.totalorder %s15, 1
    %p80 = scmp.ne.s32.totalorder %s75, %s77
    %p81 = scmp.eq.s32.totalorder %s15, 0
    %p82 = por %p80, %p81
    %p83 = scmp.ne.s32.totalorder %s75, %s77
    %p84 = scmp.eq.s32.totalorder %s20, 1
    %p85 = por %p83, %p84
    %p86 = scmp.ne.s32.totalorder %s77, %s78
    %p87 = scmp.eq.s32.totalorder %s20, 0
    %p88 = por %p86, %p87
    %p89 = scmp.ne.s32.totalorder %s77, %s78
    %p90 = scmp.eq.s32.totalorder %s21, 1
    %p91 = por %p89, %p90
    %p93 = scmp.ne.s32.totalorder %s78, %s92
    %p94 = scmp.eq.s32.totalorder %s21, 0
    %p95 = por %p93, %p94
    %s97 = sadd.s32 %s96, 1
    %p100 = scmp.eq.s32.totalorder %s15, 1
    %p101 = scmp.ne.s32.totalorder %s96, %s98
    %p102 = scmp.eq.s32.totalorder %s15, 0
    %p103 = por %p101, %p102
    %p104 = scmp.ne.s32.totalorder %s96, %s98
    %p105 = scmp.eq.s32.totalorder %s20, 1
    %p106 = por %p104, %p105
    %p107 = scmp.ne.s32.totalorder %s98, %s99
    %p108 = scmp.eq.s32.totalorder %s20, 0
    %p109 = por %p107, %p108
    %p110 = scmp.ne.s32.totalorder %s98, %s99
    %p111 = scmp.eq.s32.totalorder %s21, 1
    %p112 = por %p110, %p111
    %p114 = scmp.ne.s32.totalorder %s99, %s113
    %p115 = scmp.eq.s32.totalorder %s21, 0
    %p116 = por %p114, %p115
    %s118 = sadd.s32 %s117, 1
    %p121 = scmp.eq.s32.totalorder %s15, 1
    %p122 = scmp.ne.s32.totalorder %s117, %s119
    %p123 = scmp.eq.s32.totalorder %s15, 0
    %p124 = por %p122, %p123
    %p125 = scmp.ne.s32.totalorder %s117, %s119
    %p126 = scmp.eq.s32.totalorder %s20, 1
    %p127 = por %p125, %p126
    %p128 = scmp.ne.s32.totalorder %s119, %s120
    %p129 = scmp.eq.s32.totalorder %s20, 0
    %p130 = por %p128, %p129
    %p131 = scmp.ne.s32.totalorder %s119, %s120
    %p132 = scmp.eq.s32.totalorder %s21, 1
    %p133 = por %p131, %p132
    %p135 = scmp.ne.s32.totalorder %s120, %s134
    %p136 = scmp.eq.s32.totalorder %s21, 0
    %p137 = por %p135, %p136
    %s139 = sadd.s32 %s138, 1
    %p142 = scmp.eq.s32.totalorder %s15, 1
    %p143 = scmp.ne.s32.totalorder %s138, %s140
    %p144 = scmp.eq.s32.totalorder %s15, 0
    %p145 = por %p143, %p144
    %p146 = scmp.ne.s32.totalorder %s138, %s140
    %p147 = scmp.eq.s32.totalorder %s20, 1
    %p148 = por %p146, %p147
    %p149 = scmp.ne.s32.totalorder %s140, %s141
    %p150 = scmp.eq.s32.totalorder %s20, 0
    %p151 = por %p149, %p150
    %p152 = scmp.ne.s32.totalorder %s140, %s141
    %p153 = scmp.eq.s32.totalorder %s21, 1
    %p154 = por %p152, %p153
    %p156 = scmp.ne.s32.totalorder %s141, %s155
    %p157 = scmp.eq.s32.totalorder %s21, 0
    %p158 = por %p156, %p157
    %s160 = sadd.s32 %s159, 1
    %p163 = scmp.eq.s32.totalorder %s15, 1
    %p164 = scmp.ne.s32.totalorder %s159, %s161
    %p165 = scmp.eq.s32.totalorder %s15, 0
    %p166 = por %p164, %p165
    %p167 = scmp.ne.s32.totalorder %s159, %s161
    %p168 = scmp.eq.s32.totalorder %s20, 1
    %p169 = por %p167, %p168
    %p170 = scmp.ne.s32.totalorder %s161, %s162
    %p171 = scmp.eq.s32.totalorder %s20, 0
    %p172 = por %p170, %p171
    %p173 = scmp.ne.s32.totalorder %s161, %s162
    %p174 = scmp.eq.s32.totalorder %s21, 1
    %p175 = por %p173, %p174
    %p177 = scmp.ne.s32.totalorder %s162, %s176
    %p178 = scmp.eq.s32.totalorder %s21, 0
    %p179 = por %p177, %p178
    %s181 = sadd.s32 %s180, 1
    %p184 = scmp.eq.s32.totalorder %s15, 1
    %p185 = scmp.ne.s32.totalorder %s180, %s182
    %p186 = scmp.eq.s32.totalorder %s15, 0
    %p187 = por %p185, %p186
    %p188 = scmp.ne.s32.totalorder %s180, %s182
    %p189 = scmp.eq.s32.totalorder %s20, 1
    %p190 = por %p188, %p189
    %p191 = scmp.ne.s32.totalorder %s182, %s183
    %p192 = scmp.eq.s32.totalorder %s20, 0
    %p193 = por %p191, %p192
    %p194 = scmp.ne.s32.totalorder %s182, %s183
    %p195 = scmp.eq.s32.totalorder %s21, 1
    %p196 = por %p194, %p195
    %p198 = scmp.ne.s32.totalorder %s183, %s197
    %p199 = scmp.eq.s32.totalorder %s21, 0
    %p200 = por %p198, %p199
    %s202 = sadd.s32 %s201, 1
    %p205 = scmp.eq.s32.totalorder %s15, 1
    %p206 = scmp.ne.s32.totalorder %s201, %s203
    %p207 = scmp.eq.s32.totalorder %s15, 0
    %p208 = por %p206, %p207
    %p209 = scmp.ne.s32.totalorder %s201, %s203
    %p210 = scmp.eq.s32.totalorder %s20, 1
    %p211 = por %p209, %p210
    %p212 = scmp.ne.s32.totalorder %s203, %s204
    %p213 = scmp.eq.s32.totalorder %s20, 0
    %p214 = por %p212, %p213
    %p215 = scmp.ne.s32.totalorder %s203, %s204
    %p216 = scmp.eq.s32.totalorder %s21, 1
    %p217 = por %p215, %p216
    %p219 = scmp.ne.s32.totalorder %s204, %s218
    %p220 = scmp.eq.s32.totalorder %s21, 0
    %p221 = por %p219, %p220
    %s222 = ssub.s32 %s15, %s22
    %p223 = scmp.eq.s32.totalorder %s222, 0
    %s225 = sadd.s32 %s224, 1
    %s226 = scalar_select %p223, %s224, %s225
    %p229 = pneg %p223
    %p230 = scmp.eq.s32.totalorder %s15, 1
    %p231 = por %p229, %p230
    %p232 = scmp.ne.s32.totalorder %s224, %s227
    %p233 = scmp.eq.s32.totalorder %s15, 0
    %p234 = por %p232, %p233
    %p235 = scmp.ne.s32.totalorder %s224, %s227
    %p236 = scmp.eq.s32.totalorder %s20, 1
    %p237 = por %p235, %p236
    %p238 = scmp.ne.s32.totalorder %s227, %s228
    %p239 = scmp.eq.s32.totalorder %s20, 0
    %p240 = por %p238, %p239
    %p241 = scmp.ne.s32.totalorder %s227, %s228
    %p242 = scmp.eq.s32.totalorder %s21, 1
    %p243 = por %p241, %p242
    %p245 = scmp.ne.s32.totalorder %s228, %s244
    %p246 = scmp.eq.s32.totalorder %s21, 0
    %p247 = por %p245, %p246
    %p248 = scmp.le.s32.totalorder 1, %s15
    %p249 = scmp.lt.s32.totalorder %s15, 3
    %p250 = pnand %p248, %p249
    %p251 = pneg %p250
    // Predicated region
    $region9: #{conditional_critic_forward.1} parent=5 // pred_check
      _
    $region10: #{conditional_critic_forward.1} parent=5 // pred_check_branch
      %253 = sbr.rel (%p250) target = $region12
    $region11: #{conditional_critic_forward.1} parent=5 // pred_region
      %s254 = ssub.s32 %s15, 1
      // Predicated region
      $region13: #{conditional_critic_forward.1} parent=11 // pred_check
        %p255 = pneg %p88
      $region14: #{conditional_critic_forward.1} parent=11 // pred_check_branch
        %257 = sbr.rel (%p255) target = $region16
      $region15: #{conditional_critic_forward.1} parent=11 // pred_region
        _
      $region16: #{conditional_critic_forward.1} parent=11 // pred_fallthru
        _
      // Predicated region
      $region17: #{conditional_critic_forward.1} parent=11 // pred_check
        %p258 = pneg %p109
      $region18: #{conditional_critic_forward.1} parent=11 // pred_check_branch
        %260 = sbr.rel (%p258) target = $region20
      $region19: #{conditional_critic_forward.1} parent=11 // pred_region
        _
      $region20: #{conditional_critic_forward.1} parent=11 // pred_fallthru
        _
      // Predicated region
      $region21: #{conditional_critic_forward.1} parent=11 // pred_check
        %p261 = pneg %p130
      $region22: #{conditional_critic_forward.1} parent=11 // pred_check_branch
        %263 = sbr.rel (%p261) target = $region24
      $region23: #{conditional_critic_forward.1} parent=11 // pred_region
        _
      $region24: #{conditional_critic_forward.1} parent=11 // pred_fallthru
        _
      // Predicated region
      $region25: #{conditional_critic_forward.1} parent=11 // pred_check
        %p264 = pneg %p151
      $region26: #{conditional_critic_forward.1} parent=11 // pred_check_branch
        %266 = sbr.rel (%p264) target = $region28
      $region27: #{conditional_critic_forward.1} parent=11 // pred_region
        _
      $region28: #{conditional_critic_forward.1} parent=11 // pred_fallthru
        _
      // Predicated region
      $region29: #{conditional_critic_forward.1} parent=11 // pred_check
        %p267 = pneg %p172
      $region30: #{conditional_critic_forward.1} parent=11 // pred_check_branch
        %269 = sbr.rel (%p267) target = $region32
      $region31: #{conditional_critic_forward.1} parent=11 // pred_region
        _
      $region32: #{conditional_critic_forward.1} parent=11 // pred_fallthru
        _
      // Predicated region
      $region33: #{conditional_critic_forward.1} parent=11 // pred_check
        %p270 = pneg %p193
      $region34: #{conditional_critic_forward.1} parent=11 // pred_check_branch
        %272 = sbr.rel (%p270) target = $region36
      $region35: #{conditional_critic_forward.1} parent=11 // pred_region
        _
      $region36: #{conditional_critic_forward.1} parent=11 // pred_fallthru
        _
      // Predicated region
      $region37: #{conditional_critic_forward.1} parent=11 // pred_check
        %p273 = pneg %p214
      $region38: #{conditional_critic_forward.1} parent=11 // pred_check_branch
        %275 = sbr.rel (%p273) target = $region40
      $region39: #{conditional_critic_forward.1} parent=11 // pred_region
        _
      $region40: #{conditional_critic_forward.1} parent=11 // pred_fallthru
        _
    $region12: #{conditional_critic_forward.1} parent=5 // pred_fallthru
      _
    %p276 = scmp.lt.s32.totalorder %s15, 2
    // Predicated region
    $region41: #{conditional_critic_forward.1} parent=5 // pred_check
      %p277 = pneg %p276
    $region42: #{conditional_critic_forward.1} parent=5 // pred_check_branch
      %279 = sbr.rel (%p277) target = $region44
    $region43: #{conditional_critic_forward.1} parent=5 // pred_region
      // Predicated region
      $region45: #{conditional_critic_forward.1} parent=43 // pred_check
        %p280 = pneg %p35
      $region46: #{conditional_critic_forward.1} parent=43 // pred_check_branch
        %282 = sbr.rel (%p280) target = $region48
      $region47: #{conditional_critic_forward.1} parent=43 // pred_region
        %s283 = smul.u32 14, %s15
        %p284 = scmp.lt.s32.totalorder %s283, 27
        %s285 = scalar_select %p284, %s283, 27
        %s286 = smul.addr %s285, 8
        %s287 = scalar_lea.vmem %s0, %s286
        %s288 = smul.u32 14, %s15
      $region48: #{conditional_critic_forward.1} parent=43 // pred_fallthru
        _
      // Predicated region
      $region49: #{conditional_critic_forward.1} parent=43 // pred_check
        %p289 = pneg %p61
      $region50: #{conditional_critic_forward.1} parent=43 // pred_check_branch
        %291 = sbr.rel (%p289) target = $region52
      $region51: #{conditional_critic_forward.1} parent=43 // pred_region
        %s292 = smul.u32 14, %s15
        %p293 = scmp.lt.s32.totalorder %s292, 27
        %s294 = scalar_select %p293, %s292, 27
        %s295 = smul.addr %s294, 4
        %s296 = scalar_lea.vmem %s1, %s295
        %s297 = smul.u32 14, %s15
      $region52: #{conditional_critic_forward.1} parent=43 // pred_fallthru
        _
    $region44: #{conditional_critic_forward.1} parent=5 // pred_fallthru
      _
    %p298 = scmp.le.s32.totalorder 1, %s15
    %p299 = scmp.lt.s32.totalorder %s15, 3
    %p300 = pnand %p298, %p299
    %p301 = pneg %p300
    // Predicated region
    $region53: #{conditional_critic_forward.1} parent=5 // pred_check
      _
    $region54: #{conditional_critic_forward.1} parent=5 // pred_check_branch
      %303 = sbr.rel (%p300) target = $region56
    $region55: #{conditional_critic_forward.1} parent=5 // pred_region
      %s304 = ssub.s32 %s15, 1
      %s305 = smul.u32 14, %s20
      %p306 = scmp.lt.s32.totalorder %s305, 27
      %s307 = scalar_select %p306, %s305, 27
      %s308 = smul.addr %s307, 8
      %s309 = scalar_lea.vmem %s0, %s308
      %p310 = pneg %p41
      %p311 = pneg %p38
      %s312 = smul.u32 14, %s20
      %p313 = scmp.lt.s32.totalorder %s312, 27
      %s314 = scalar_select %p313, %s312, 27
      %s315 = smul.addr %s314, 4
      %s316 = scalar_lea.vmem %s1, %s315
      %p317 = pneg %p67
      %p318 = pneg %p64
      %p319 = pneg %p88
      %p320 = pneg %p85
      %p321 = pneg %p109
      %p322 = pneg %p106
      %p323 = pneg %p130
      %p324 = pneg %p127
      %p325 = pneg %p151
      %p326 = pneg %p148
      %p327 = pneg %p172
      %p328 = pneg %p169
      %p329 = pneg %p193
      %p330 = pneg %p190
      %p331 = pneg %p214
      %p332 = pneg %p211
      %p333 = pneg %p240
      %p334 = pneg %p237
      %s335 = smul.u32 14, %s20
      %p336 = scmp.lt.s32.totalorder %s335, 27
      %s337 = scalar_select %p336, %s335, 27
      %s338 = smul.addr %s337, 8
      %s339 = scalar_lea.vmem %s9, %s338
      %s340 = smul.u32 14, %s20
      %p341 = scmp.lt.s32.totalorder %s340, 27
      %s342 = scalar_select %p341, %s340, 27
      %s343 = smul.addr %s342, 8
      %s344 = scalar_lea.vmem %s0, %s343
      %s345 = smul.u32 14, %s20
      %s346 = smul.u32 14, %s20
      %p347 = scmp.lt.s32.totalorder %s346, 27
      %s348 = scalar_select %p347, %s346, 27
      %s349 = smul.addr %s348, 4
      %s350 = scalar_lea.vmem %s1, %s349
      %s351 = smul.u32 14, %s20
      %s352 = smul.u32 14, %s20
      %p353 = scmp.lt.s32.totalorder %s352, 27
      %s354 = scalar_select %p353, %s352, 27
      %s355 = smul.addr %s354, 8
      %s356 = scalar_lea.vmem %s9, %s355
      %s357 = smul.u32 14, %s20
      %v359 = vld [vmem:[%s350] sm:$0xf]
      %v360 = vld [vmem:[%s350 + $0x4] sm:$0xf]
      %v361 = vld [vmem:[%s350 + $0x8] sm:$0xf]
      %v362 = vld [vmem:[%s350 + $0xc] sm:$0xf]
      %v363 = vld [vmem:[%s350 + $0x10] sm:$0xf]
      %v364 = vld [vmem:[%s350 + $0x14] sm:$0xf]
      %v365 = vld [vmem:[%s350 + $0x18] sm:$0xf]
      %v366 = vld [vmem:[%s350 + $0x1c] sm:$0xf]
      %v367 = vld [vmem:[%s350 + $0x20] sm:$0xf]
      %v368 = vld [vmem:[%s350 + $0x24] sm:$0xf]
      %v369 = vld [vmem:[%s350 + $0x28] sm:$0xf]
      %v370 = vld [vmem:[%s350 + $0x2c] sm:$0xf]
      %v371 = vld [vmem:[%s350 + $0x30] sm:$0xf]
      %v372 = vld [vmem:[%s350 + $0x34] sm:$0xf]
      %v373 = vld [vmem:[%s2] sm:$0xf]
      %v374 = vld [vmem:[%s2 + $0x4] sm:$0xf]
      %v375 = vld [vmem:[%s344] sm:$0xff]
      %v376 = vld [vmem:[%s344 + $0x8] sm:$0xff]
      %v377 = vld [vmem:[%s344 + $0x10] sm:$0xff]
      %v378 = vld [vmem:[%s344 + $0x18] sm:$0xff]
      %v379 = vld [vmem:[%s344 + $0x20] sm:$0xff]
      %v380 = vld [vmem:[%s344 + $0x28] sm:$0xff]
      %v381 = vld [vmem:[%s344 + $0x30] sm:$0xff]
      %v382 = vld [vmem:[%s344 + $0x38] sm:$0xff]
      %v383 = vld [vmem:[%s344 + $0x40] sm:$0xff]
      %v384 = vld [vmem:[%s344 + $0x48] sm:$0xff]
      %v385 = vld [vmem:[%s344 + $0x50] sm:$0xff]
      %v386 = vld [vmem:[%s344 + $0x58] sm:$0xff]
      %v387 = vld [vmem:[%s344 + $0x60] sm:$0xff]
      %v388 = vld [vmem:[%s344 + $0x68] sm:$0xff]
      %v389 = vld [vmem:[%s3] sm:$0xf]
      %vm390 = vcmp.eq.s32.totalorder %v375, 0
      %vm391 = vcmp.eq.s32.totalorder %v376, 0
      %vm392 = vcmp.eq.s32.totalorder %v377, 0
      %vm393 = vcmp.eq.s32.totalorder %v378, 0
      %vm394 = vcmp.eq.s32.totalorder %v379, 0
      %vm395 = vcmp.eq.s32.totalorder %v380, 0
      %vm396 = vcmp.eq.s32.totalorder %v381, 0
      %vm397 = vcmp.eq.s32.totalorder %v382, 0
      %vm398 = vcmp.eq.s32.totalorder %v383, 0
      %vm399 = vcmp.eq.s32.totalorder %v384, 0
      %vm400 = vcmp.eq.s32.totalorder %v385, 0
      %vm401 = vcmp.eq.s32.totalorder %v386, 0
      %vm402 = vcmp.eq.s32.totalorder %v387, 0
      %vm403 = vcmp.eq.s32.totalorder %v388, 0
      %v404 = vsel %vm390, 1, 0
      %v405 = vsel %vm391, 1, 0
      %v406 = vsel %vm392, 1, 0
      %v407 = vsel %vm393, 1, 0
      %v408 = vsel %vm394, 1, 0
      %v409 = vsel %vm395, 1, 0
      %v410 = vsel %vm396, 1, 0
      %v411 = vsel %vm397, 1, 0
      %v412 = vsel %vm398, 1, 0
      %v413 = vsel %vm399, 1, 0
      %v414 = vsel %vm400, 1, 0
      %v415 = vsel %vm401, 1, 0
      %v416 = vsel %vm402, 1, 0
      %v417 = vsel %vm403, 1, 0
      %418 = vset.pattern.permute.xlu0 0
      %419 = vperm.xlu0 %418, %v404
      %v420 = vpop.permute.xlu0 %419
      %421 = vset.pattern.permute.xlu0 0
      %422 = vperm.xlu0 %421, %v405
      %v423 = vpop.permute.xlu0 %422
      %424 = vset.pattern.permute.xlu0 0
      %425 = vperm.xlu0 %424, %v406
      %v426 = vpop.permute.xlu0 %425
      %427 = vset.pattern.permute.xlu0 0
      %428 = vperm.xlu0 %427, %v407
      %v429 = vpop.permute.xlu0 %428
      %430 = vset.pattern.permute.xlu0 0
      %431 = vperm.xlu0 %430, %v408
      %v432 = vpop.permute.xlu0 %431
      %433 = vset.pattern.permute.xlu0 0
      %434 = vperm.xlu0 %433, %v409
      %v435 = vpop.permute.xlu0 %434
      %436 = vset.pattern.permute.xlu0 0
      %437 = vperm.xlu0 %436, %v410
      %v438 = vpop.permute.xlu0 %437
      %439 = vset.pattern.permute.xlu0 0
      %440 = vperm.xlu0 %439, %v411
      %v441 = vpop.permute.xlu0 %440
      %442 = vset.pattern.permute.xlu0 0
      %443 = vperm.xlu0 %442, %v412
      %v444 = vpop.permute.xlu0 %443
      %445 = vset.pattern.permute.xlu0 0
      %446 = vperm.xlu0 %445, %v413
      %v447 = vpop.permute.xlu0 %446
      %448 = vset.pattern.permute.xlu0 0
      %449 = vperm.xlu0 %448, %v414
      %v450 = vpop.permute.xlu0 %449
      %451 = vset.pattern.permute.xlu0 0
      %452 = vperm.xlu0 %451, %v415
      %v453 = vpop.permute.xlu0 %452
      %454 = vset.pattern.permute.xlu0 0
      %455 = vperm.xlu0 %454, %v416
      %v456 = vpop.permute.xlu0 %455
      %457 = vset.pattern.permute.xlu0 0
      %458 = vperm.xlu0 %457, %v417
      %v459 = vpop.permute.xlu0 %458
      %vm460 = vcmp.eq.s32.totalorder %v420, 1
      %vm461 = vcmp.eq.s32.totalorder %v423, 1
      %vm462 = vcmp.eq.s32.totalorder %v426, 1
      %vm463 = vcmp.eq.s32.totalorder %v429, 1
      %vm464 = vcmp.eq.s32.totalorder %v432, 1
      %vm465 = vcmp.eq.s32.totalorder %v435, 1
      %vm466 = vcmp.eq.s32.totalorder %v438, 1
      %vm467 = vcmp.eq.s32.totalorder %v441, 1
      %vm468 = vcmp.eq.s32.totalorder %v444, 1
      %vm469 = vcmp.eq.s32.totalorder %v447, 1
      %vm470 = vcmp.eq.s32.totalorder %v450, 1
      %vm471 = vcmp.eq.s32.totalorder %v453, 1
      %vm472 = vcmp.eq.s32.totalorder %v456, 1
      %vm473 = vcmp.eq.s32.totalorder %v459, 1
      %v474 = vlaneseq
      %v475 = vshrl.u32 %v474, 7
      %v476 = vsub.s32 0, %v475
      %v477 = vrot.slane %v389, %v476
      %v478 = vsel %vm460, %v477, 0.0
      %v479 = vsel %vm461, %v477, 0.0
      %v480 = vsel %vm462, %v477, 0.0
      %v481 = vsel %vm463, %v477, 0.0
      %v482 = vsel %vm464, %v477, 0.0
      %v483 = vsel %vm465, %v477, 0.0
      %v484 = vsel %vm466, %v477, 0.0
      %v485 = vsel %vm467, %v477, 0.0
      %v486 = vsel %vm468, %v477, 0.0
      %v487 = vsel %vm469, %v477, 0.0
      %v488 = vsel %vm470, %v477, 0.0
      %v489 = vsel %vm471, %v477, 0.0
      %v490 = vsel %vm472, %v477, 0.0
      %v491 = vsel %vm473, %v477, 0.0
      %v506 = vunpack.c.l.b16 %v359
      %v507 = vunpack.c.l.b16 %v360
      %v508 = vunpack.c.l.b16 %v361
      %v509 = vunpack.c.l.b16 %v362
      %v510 = vunpack.c.l.b16 %v363
      %v511 = vunpack.c.l.b16 %v364
      %v512 = vunpack.c.l.b16 %v365
      %v513 = vunpack.c.l.b16 %v366
      %v514 = vunpack.c.l.b16 %v367
      %v515 = vunpack.c.l.b16 %v368
      %v516 = vunpack.c.l.b16 %v369
      %v517 = vunpack.c.l.b16 %v370
      %v518 = vunpack.c.l.b16 %v371
      %v519 = vunpack.c.l.b16 %v372
      %v520 = vpack.c.b16 %v507, %v506
      %v521 = vpack.c.b16 %v509, %v508
      %v522 = vpack.c.b16 %v511, %v510
      %v523 = vpack.c.b16 %v513, %v512
      %v524 = vpack.c.b16 %v515, %v514
      %v525 = vpack.c.b16 %v517, %v516
      %v526 = vpack.c.b16 %v519, %v518
      %v529 = vunpack.c.l.b16 %v373
      %v530 = vunpack.c.l.b16 %v374
      %v531 = vpack.c.b16 %v530, %v529
      %vm533 = vcmask 130048
      %v535 = vsel %vm533, %v520, 0
      %v538 = vsel %vm533, %v521, 0
      %v541 = vsel %vm533, %v522, 0
      %v544 = vsel %vm533, %v523, 0
      %v547 = vsel %vm533, %v524, 0
      %v550 = vsel %vm533, %v525, 0
      %v553 = vsel %vm533, %v526, 0
      %555 = vmatprep.subr.bf16.mxu0 0
      %556 = vmatpush1.bf16.msra.mxu0 %v531
      %557 = vmatprep.subr.bf16.mxu0 0
      %558 = vmatpush1.bf16.msra.mxu0 0
      %559 = vmatprep.subr.bf16.mxu0 0
      %560 = vmatpush1.bf16.msra.mxu0 0
      %561 = vmatprep.subr.bf16.mxu0 0
      %562 = vmatpush1.bf16.msra.mxu0 0
      %563 = vmatprep.subr.bf16.mxu0 0
      %564 = vmatpush1.bf16.msra.mxu0 0
      %565 = vmatprep.subr.bf16.mxu0 0
      %566 = vmatpush1.bf16.msra.mxu0 0
      %567 = vmatprep.subr.bf16.mxu0 0
      %568 = vmatpush1.bf16.msra.mxu0 0
      %569 = vmatprep.subr.bf16.mxu0 0
      %570 = vmatpush1.bf16.msra.mxu0 0
      %571 = vmatprep.subr.bf16.mxu0 0
      %572 = vmatpush1.bf16.msra.mxu0 0
      %573 = vmatprep.subr.bf16.mxu0 0
      %574 = vmatpush1.bf16.msra.mxu0 0
      %575 = vmatprep.subr.bf16.mxu0 0
      %576 = vmatpush1.bf16.msra.mxu0 0
      %577 = vmatprep.subr.bf16.mxu0 0
      %578 = vmatpush1.bf16.msra.mxu0 0
      %579 = vmatprep.subr.bf16.mxu0 0
      %580 = vmatpush1.bf16.msra.mxu0 0
      %581 = vmatprep.subr.bf16.mxu0 0
      %582 = vmatpush1.bf16.msra.mxu0 0
      %583 = vmatprep.subr.bf16.mxu0 0
      %584 = vmatpush1.bf16.msra.mxu0 0
      %585 = vmatprep.subr.bf16.mxu0 0
      %586 = vmatpush1.bf16.msra.mxu0 0
      %587 = vmatprep.mubr.bf16.mxu0 0
      %588 = vmatmul.mubr.bf16.gmra.mrb[0].mxu0 %v535
      %v589 = vpop.f32.mrb[0].mxu0
      %v590 = vadd.f32 %v478, %v589
      %v591 = vpop.f32.mrb[0].mxu0
      %v592 = vpop.f32.mrb[0].mxu0
      %v593 = vadd.f32 %v479, %v592
      %v594 = vpop.f32.mrb[0].mxu0
      %595 = vmatprep.mubr.bf16.mxu0 0
      %596 = vmatmul.mubr.bf16.gmra.mrb[0].mxu0 %v538
      %v597 = vpop.f32.mrb[0].mxu0
      %v598 = vadd.f32 %v480, %v597
      %v599 = vpop.f32.mrb[0].mxu0
      %v600 = vpop.f32.mrb[0].mxu0
      %v601 = vadd.f32 %v481, %v600
      %v602 = vpop.f32.mrb[0].mxu0
      %603 = vmatprep.mubr.bf16.mxu0 0
      %604 = vmatmul.mubr.bf16.gmra.mrb[0].mxu0 %v541
      %v605 = vpop.f32.mrb[0].mxu0
      %v606 = vadd.f32 %v482, %v605
      %v607 = vpop.f32.mrb[0].mxu0
      %v608 = vpop.f32.mrb[0].mxu0
      %v609 = vadd.f32 %v483, %v608
      %v610 = vpop.f32.mrb[0].mxu0
      %611 = vmatprep.mubr.bf16.mxu0 0
      %612 = vmatmul.mubr.bf16.gmra.mrb[0].mxu0 %v544
      %v613 = vpop.f32.mrb[0].mxu0
      %v614 = vadd.f32 %v484, %v613
      %v615 = vpop.f32.mrb[0].mxu0
      %v616 = vpop.f32.mrb[0].mxu0
      %v617 = vadd.f32 %v485, %v616
      %v618 = vpop.f32.mrb[0].mxu0
      %619 = vmatprep.mubr.bf16.mxu0 0
      %620 = vmatmul.mubr.bf16.gmra.mrb[0].mxu0 %v547
      %v621 = vpop.f32.mrb[0].mxu0
      %v622 = vadd.f32 %v486, %v621
      %v623 = vpop.f32.mrb[0].mxu0
      %v624 = vpop.f32.mrb[0].mxu0
      %v625 = vadd.f32 %v487, %v624
      %v626 = vpop.f32.mrb[0].mxu0
      %627 = vmatprep.mubr.bf16.mxu0 0
      %628 = vmatmul.mubr.bf16.gmra.mrb[0].mxu0 %v550
      %v629 = vpop.f32.mrb[0].mxu0
      %v630 = vadd.f32 %v488, %v629
      %v631 = vpop.f32.mrb[0].mxu0
      %v632 = vpop.f32.mrb[0].mxu0
      %v633 = vadd.f32 %v489, %v632
      %v634 = vpop.f32.mrb[0].mxu0
      %635 = vmatprep.mubr.bf16.mxu0 0
      %636 = vmatmul.mubr.bf16.gmra.mrb[0].mxu0 %v553
      %v637 = vpop.f32.mrb[0].mxu0
      %v638 = vadd.f32 %v490, %v637
      %v639 = vpop.f32.mrb[0].mxu0
      %v640 = vpop.f32.mrb[0].mxu0
      %v641 = vadd.f32 %v491, %v640
      %v642 = vpop.f32.mrb[0].mxu0
      %643 = vdwg.mxu0
      %vm644 = vcmp.eq.s32.totalorder %v375, 1
      %vm645 = vcmp.eq.s32.totalorder %v376, 1
      %vm646 = vcmp.eq.s32.totalorder %v377, 1
      %vm647 = vcmp.eq.s32.totalorder %v378, 1
      %vm648 = vcmp.eq.s32.totalorder %v379, 1
      %vm649 = vcmp.eq.s32.totalorder %v380, 1
      %vm650 = vcmp.eq.s32.totalorder %v381, 1
      %vm651 = vcmp.eq.s32.totalorder %v382, 1
      %vm652 = vcmp.eq.s32.totalorder %v383, 1
      %vm653 = vcmp.eq.s32.totalorder %v384, 1
      %vm654 = vcmp.eq.s32.totalorder %v385, 1
      %vm655 = vcmp.eq.s32.totalorder %v386, 1
      %vm656 = vcmp.eq.s32.totalorder %v387, 1
      %vm657 = vcmp.eq.s32.totalorder %v388, 1
      %v658 = vsel %vm644, 1, 0
      %v659 = vsel %vm645, 1, 0
      %v660 = vsel %vm646, 1, 0
      %v661 = vsel %vm647, 1, 0
      %v662 = vsel %vm648, 1, 0
      %v663 = vsel %vm649, 1, 0
      %v664 = vsel %vm650, 1, 0
      %v665 = vsel %vm651, 1, 0
      %v666 = vsel %vm652, 1, 0
      %v667 = vsel %vm653, 1, 0
      %v668 = vsel %vm654, 1, 0
      %v669 = vsel %vm655, 1, 0
      %v670 = vsel %vm656, 1, 0
      %v671 = vsel %vm657, 1, 0
      %672 = vset.pattern.permute.xlu0 0
      %673 = vperm.xlu0 %672, %v658
      %v674 = vpop.permute.xlu0 %673
      %675 = vset.pattern.permute.xlu0 0
      %676 = vperm.xlu0 %675, %v659
      %v677 = vpop.permute.xlu0 %676
      %678 = vset.pattern.permute.xlu0 0
      %679 = vperm.xlu0 %678, %v660
      %v680 = vpop.permute.xlu0 %679
      %681 = vset.pattern.permute.xlu0 0
      %682 = vperm.xlu0 %681, %v661
      %v683 = vpop.permute.xlu0 %682
      %684 = vset.pattern.permute.xlu0 0
      %685 = vperm.xlu0 %684, %v662
      %v686 = vpop.permute.xlu0 %685
      %687 = vset.pattern.permute.xlu0 0
      %688 = vperm.xlu0 %687, %v663
      %v689 = vpop.permute.xlu0 %688
      %690 = vset.pattern.permute.xlu0 0
      %691 = vperm.xlu0 %690, %v664
      %v692 = vpop.permute.xlu0 %691
      %693 = vset.pattern.permute.xlu0 0
      %694 = vperm.xlu0 %693, %v665
      %v695 = vpop.permute.xlu0 %694
      %696 = vset.pattern.permute.xlu0 0
      %697 = vperm.xlu0 %696, %v666
      %v698 = vpop.permute.xlu0 %697
      %699 = vset.pattern.permute.xlu0 0
      %700 = vperm.xlu0 %699, %v667
      %v701 = vpop.permute.xlu0 %700
      %702 = vset.pattern.permute.xlu0 0
      %703 = vperm.xlu0 %702, %v668
      %v704 = vpop.permute.xlu0 %703
      %705 = vset.pattern.permute.xlu0 0
      %706 = vperm.xlu0 %705, %v669
      %v707 = vpop.permute.xlu0 %706
      %708 = vset.pattern.permute.xlu0 0
      %709 = vperm.xlu0 %708, %v670
      %v710 = vpop.permute.xlu0 %709
      %711 = vset.pattern.permute.xlu0 0
      %712 = vperm.xlu0 %711, %v671
      %v713 = vpop.permute.xlu0 %712
      %vm714 = vcmp.eq.s32.totalorder %v674, 1
      %vm715 = vcmp.eq.s32.totalorder %v677, 1
      %vm716 = vcmp.eq.s32.totalorder %v680, 1
      %vm717 = vcmp.eq.s32.totalorder %v683, 1
      %vm718 = vcmp.eq.s32.totalorder %v686, 1
      %vm719 = vcmp.eq.s32.totalorder %v689, 1
      %vm720 = vcmp.eq.s32.totalorder %v692, 1
      %vm721 = vcmp.eq.s32.totalorder %v695, 1
      %vm722 = vcmp.eq.s32.totalorder %v698, 1
      %vm723 = vcmp.eq.s32.totalorder %v701, 1
      %vm724 = vcmp.eq.s32.totalorder %v704, 1
      %vm725 = vcmp.eq.s32.totalorder %v707, 1
      %vm726 = vcmp.eq.s32.totalorder %v710, 1
      %vm727 = vcmp.eq.s32.totalorder %v713, 1
      %v728 = vlaneseq
      %v729 = vshrl.u32 %v728, 7
      %v730 = vsub.s32 1, %v729
      %v731 = vrot.slane %v389, %v730
      %v732 = vsel %vm714, %v731, 0.0
      %v733 = vsel %vm715, %v731, 0.0
      %v734 = vsel %vm716, %v731, 0.0
      %v735 = vsel %vm717, %v731, 0.0
      %v736 = vsel %vm718, %v731, 0.0
      %v737 = vsel %vm719, %v731, 0.0
      %v738 = vsel %vm720, %v731, 0.0
      %v739 = vsel %vm721, %v731, 0.0
      %v740 = vsel %vm722, %v731, 0.0
      %v741 = vsel %vm723, %v731, 0.0
      %v742 = vsel %vm724, %v731, 0.0
      %v743 = vsel %vm725, %v731, 0.0
      %v744 = vsel %vm726, %v731, 0.0
      %v745 = vsel %vm727, %v731, 0.0
      %v746 = vadd.f32 %v590, %v732
      %v747 = vadd.f32 %v593, %v733
      %v748 = vadd.f32 %v598, %v734
      %v749 = vadd.f32 %v601, %v735
      %v750 = vadd.f32 %v606, %v736
      %v751 = vadd.f32 %v609, %v737
      %v752 = vadd.f32 %v614, %v738
      %v753 = vadd.f32 %v617, %v739
      %v754 = vadd.f32 %v622, %v740
      %v755 = vadd.f32 %v625, %v741
      %v756 = vadd.f32 %v630, %v742
      %v757 = vadd.f32 %v633, %v743
      %v758 = vadd.f32 %v638, %v744
      %v759 = vadd.f32 %v641, %v745
      %vm760 = vcmp.eq.s32.totalorder %v375, 2
      %vm761 = vcmp.eq.s32.totalorder %v376, 2
      %vm762 = vcmp.eq.s32.totalorder %v377, 2
      %vm763 = vcmp.eq.s32.totalorder %v378, 2
      %vm764 = vcmp.eq.s32.totalorder %v379, 2
      %vm765 = vcmp.eq.s32.totalorder %v380, 2
      %vm766 = vcmp.eq.s32.totalorder %v381, 2
      %vm767 = vcmp.eq.s32.totalorder %v382, 2
      %vm768 = vcmp.eq.s32.totalorder %v383, 2
      %vm769 = vcmp.eq.s32.totalorder %v384, 2
      %vm770 = vcmp.eq.s32.totalorder %v385, 2
      %vm771 = vcmp.eq.s32.totalorder %v386, 2
      %vm772 = vcmp.eq.s32.totalorder %v387, 2
      %vm773 = vcmp.eq.s32.totalorder %v388, 2
      %v774 = vsel %vm760, 1, 0
      %v775 = vsel %vm761, 1, 0
      %v776 = vsel %vm762, 1, 0
      %v777 = vsel %vm763, 1, 0
      %v778 = vsel %vm764, 1, 0
      %v779 = vsel %vm765, 1, 0
      %v780 = vsel %vm766, 1, 0
      %v781 = vsel %vm767, 1, 0
      %v782 = vsel %vm768, 1, 0
      %v783 = vsel %vm769, 1, 0
      %v784 = vsel %vm770, 1, 0
      %v785 = vsel %vm771, 1, 0
      %v786 = vsel %vm772, 1, 0
      %v787 = vsel %vm773, 1, 0
      %788 = vset.pattern.permute.xlu0 0
      %789 = vperm.xlu0 %788, %v774
      %v790 = vpop.permute.xlu0 %789
      %791 = vset.pattern.permute.xlu0 0
      %792 = vperm.xlu0 %791, %v775
      %v793 = vpop.permute.xlu0 %792
      %794 = vset.pattern.permute.xlu0 0
      %795 = vperm.xlu0 %794, %v776
      %v796 = vpop.permute.xlu0 %795
      %797 = vset.pattern.permute.xlu0 0
      %798 = vperm.xlu0 %797, %v777
      %v799 = vpop.permute.xlu0 %798
      %800 = vset.pattern.permute.xlu0 0
      %801 = vperm.xlu0 %800, %v778
      %v802 = vpop.permute.xlu0 %801
      %803 = vset.pattern.permute.xlu0 0
      %804 = vperm.xlu0 %803, %v779
      %v805 = vpop.permute.xlu0 %804
      %806 = vset.pattern.permute.xlu0 0
      %807 = vperm.xlu0 %806, %v780
      %v808 = vpop.permute.xlu0 %807
      %809 = vset.pattern.permute.xlu0 0
      %810 = vperm.xlu0 %809, %v781
      %v811 = vpop.permute.xlu0 %810
      %812 = vset.pattern.permute.xlu0 0
      %813 = vperm.xlu0 %812, %v782
      %v814 = vpop.permute.xlu0 %813
      %815 = vset.pattern.permute.xlu0 0
      %816 = vperm.xlu0 %815, %v783
      %v817 = vpop.permute.xlu0 %816
      %818 = vset.pattern.permute.xlu0 0
      %819 = vperm.xlu0 %818, %v784
      %v820 = vpop.permute.xlu0 %819
      %821 = vset.pattern.permute.xlu0 0
      %822 = vperm.xlu0 %821, %v785
      %v823 = vpop.permute.xlu0 %822
      %824 = vset.pattern.permute.xlu0 0
      %825 = vperm.xlu0 %824, %v786
      %v826 = vpop.permute.xlu0 %825
      %827 = vset.pattern.permute.xlu0 0
      %828 = vperm.xlu0 %827, %v787
      %v829 = vpop.permute.xlu0 %828
      %vm830 = vcmp.eq.s32.totalorder %v790, 1
      %vm831 = vcmp.eq.s32.totalorder %v793, 1
      %vm832 = vcmp.eq.s32.totalorder %v796, 1
      %vm833 = vcmp.eq.s32.totalorder %v799, 1
      %vm834 = vcmp.eq.s32.totalorder %v802, 1
      %vm835 = vcmp.eq.s32.totalorder %v805, 1
      %vm836 = vcmp.eq.s32.totalorder %v808, 1
      %vm837 = vcmp.eq.s32.totalorder %v811, 1
      %vm838 = vcmp.eq.s32.totalorder %v814, 1
      %vm839 = vcmp.eq.s32.totalorder %v817, 1
      %vm840 = vcmp.eq.s32.totalorder %v820, 1
      %vm841 = vcmp.eq.s32.totalorder %v823, 1
      %vm842 = vcmp.eq.s32.totalorder %v826, 1
      %vm843 = vcmp.eq.s32.totalorder %v829, 1
      %v844 = vlaneseq
      %v845 = vshrl.u32 %v844, 7
      %v846 = vsub.s32 2, %v845
      %v847 = vrot.slane %v389, %v846
      %v848 = vsel %vm830, %v847, 0.0
      %v849 = vsel %vm831, %v847, 0.0
      %v850 = vsel %vm832, %v847, 0.0
      %v851 = vsel %vm833, %v847, 0.0
      %v852 = vsel %vm834, %v847, 0.0
      %v853 = vsel %vm835, %v847, 0.0
      %v854 = vsel %vm836, %v847, 0.0
      %v855 = vsel %vm837, %v847, 0.0
      %v856 = vsel %vm838, %v847, 0.0
      %v857 = vsel %vm839, %v847, 0.0
      %v858 = vsel %vm840, %v847, 0.0
      %v859 = vsel %vm841, %v847, 0.0
      %v860 = vsel %vm842, %v847, 0.0
      %v861 = vsel %vm843, %v847, 0.0
      %v862 = vadd.f32 %v746, %v848
      %v863 = vadd.f32 %v747, %v849
      %v864 = vadd.f32 %v748, %v850
      %v865 = vadd.f32 %v749, %v851
      %v866 = vadd.f32 %v750, %v852
      %v867 = vadd.f32 %v751, %v853
      %v868 = vadd.f32 %v752, %v854
      %v869 = vadd.f32 %v753, %v855
      %v870 = vadd.f32 %v754, %v856
      %v871 = vadd.f32 %v755, %v857
      %v872 = vadd.f32 %v756, %v858
      %v873 = vadd.f32 %v757, %v859
      %v874 = vadd.f32 %v758, %v860
      %v875 = vadd.f32 %v759, %v861
      %vm876 = vcmp.eq.s32.totalorder %v375, 3
      %vm877 = vcmp.eq.s32.totalorder %v376, 3
      %vm878 = vcmp.eq.s32.totalorder %v377, 3
      %vm879 = vcmp.eq.s32.totalorder %v378, 3
      %vm880 = vcmp.eq.s32.totalorder %v379, 3
      %vm881 = vcmp.eq.s32.totalorder %v380, 3
      %vm882 = vcmp.eq.s32.totalorder %v381, 3
      %vm883 = vcmp.eq.s32.totalorder %v382, 3
      %vm884 = vcmp.eq.s32.totalorder %v383, 3
      %vm885 = vcmp.eq.s32.totalorder %v384, 3
      %vm886 = vcmp.eq.s32.totalorder %v385, 3
      %vm887 = vcmp.eq.s32.totalorder %v386, 3
      %vm888 = vcmp.eq.s32.totalorder %v387, 3
      %vm889 = vcmp.eq.s32.totalorder %v388, 3
      %v890 = vsel %vm876, 1, 0
      %v891 = vsel %vm877, 1, 0
      %v892 = vsel %vm878, 1, 0
      %v893 = vsel %vm879, 1, 0
      %v894 = vsel %vm880, 1, 0
      %v895 = vsel %vm881, 1, 0
      %v896 = vsel %vm882, 1, 0
      %v897 = vsel %vm883, 1, 0
      %v898 = vsel %vm884, 1, 0
      %v899 = vsel %vm885, 1, 0
      %v900 = vsel %vm886, 1, 0
      %v901 = vsel %vm887, 1, 0
      %v902 = vsel %vm888, 1, 0
      %v903 = vsel %vm889, 1, 0
      %904 = vset.pattern.permute.xlu0 0
      %905 = vperm.xlu0 %904, %v890
      %v906 = vpop.permute.xlu0 %905
      %907 = vset.pattern.permute.xlu0 0
      %908 = vperm.xlu0 %907, %v891
      %v909 = vpop.permute.xlu0 %908
      %910 = vset.pattern.permute.xlu0 0
      %911 = vperm.xlu0 %910, %v892
      %v912 = vpop.permute.xlu0 %911
      %913 = vset.pattern.permute.xlu0 0
      %914 = vperm.xlu0 %913, %v893
      %v915 = vpop.permute.xlu0 %914
      %916 = vset.pattern.permute.xlu0 0
      %917 = vperm.xlu0 %916, %v894
      %v918 = vpop.permute.xlu0 %917
      %919 = vset.pattern.permute.xlu0 0
      %920 = vperm.xlu0 %919, %v895
      %v921 = vpop.permute.xlu0 %920
      %922 = vset.pattern.permute.xlu0 0
      %923 = vperm.xlu0 %922, %v896
      %v924 = vpop.permute.xlu0 %923
      %925 = vset.pattern.permute.xlu0 0
      %926 = vperm.xlu0 %925, %v897
      %v927 = vpop.permute.xlu0 %926
      %928 = vset.pattern.permute.xlu0 0
      %929 = vperm.xlu0 %928, %v898
      %v930 = vpop.permute.xlu0 %929
      %931 = vset.pattern.permute.xlu0 0
      %932 = vperm.xlu0 %931, %v899
      %v933 = vpop.permute.xlu0 %932
      %934 = vset.pattern.permute.xlu0 0
      %935 = vperm.xlu0 %934, %v900
      %v936 = vpop.permute.xlu0 %935
      %937 = vset.pattern.permute.xlu0 0
      %938 = vperm.xlu0 %937, %v901
      %v939 = vpop.permute.xlu0 %938
      %940 = vset.pattern.permute.xlu0 0
      %941 = vperm.xlu0 %940, %v902
      %v942 = vpop.permute.xlu0 %941
      %943 = vset.pattern.permute.xlu0 0
      %944 = vperm.xlu0 %943, %v903
      %v945 = vpop.permute.xlu0 %944
      %vm946 = vcmp.eq.s32.totalorder %v906, 1
      %vm947 = vcmp.eq.s32.totalorder %v909, 1
      %vm948 = vcmp.eq.s32.totalorder %v912, 1
      %vm949 = vcmp.eq.s32.totalorder %v915, 1
      %vm950 = vcmp.eq.s32.totalorder %v918, 1
      %vm951 = vcmp.eq.s32.totalorder %v921, 1
      %vm952 = vcmp.eq.s32.totalorder %v924, 1
      %vm953 = vcmp.eq.s32.totalorder %v927, 1
      %vm954 = vcmp.eq.s32.totalorder %v930, 1
      %vm955 = vcmp.eq.s32.totalorder %v933, 1
      %vm956 = vcmp.eq.s32.totalorder %v936, 1
      %vm957 = vcmp.eq.s32.totalorder %v939, 1
      %vm958 = vcmp.eq.s32.totalorder %v942, 1
      %vm959 = vcmp.eq.s32.totalorder %v945, 1
      %v960 = vlaneseq
      %v961 = vshrl.u32 %v960, 7
      %v962 = vsub.s32 3, %v961
      %v963 = vrot.slane %v389, %v962
      %v964 = vsel %vm946, %v963, 0.0
      %v965 = vsel %vm947, %v963, 0.0
      %v966 = vsel %vm948, %v963, 0.0
      %v967 = vsel %vm949, %v963, 0.0
      %v968 = vsel %vm950, %v963, 0.0
      %v969 = vsel %vm951, %v963, 0.0
      %v970 = vsel %vm952, %v963, 0.0
      %v971 = vsel %vm953, %v963, 0.0
      %v972 = vsel %vm954, %v963, 0.0
      %v973 = vsel %vm955, %v963, 0.0
      %v974 = vsel %vm956, %v963, 0.0
      %v975 = vsel %vm957, %v963, 0.0
      %v976 = vsel %vm958, %v963, 0.0
      %v977 = vsel %vm959, %v963, 0.0
      %v978 = vadd.f32 %v862, %v964
      %v979 = vadd.f32 %v863, %v965
      %v980 = vadd.f32 %v864, %v966
      %v981 = vadd.f32 %v865, %v967
      %v982 = vadd.f32 %v866, %v968
      %v983 = vadd.f32 %v867, %v969
      %v984 = vadd.f32 %v868, %v970
      %v985 = vadd.f32 %v869, %v971
      %v986 = vadd.f32 %v870, %v972
      %v987 = vadd.f32 %v871, %v973
      %v988 = vadd.f32 %v872, %v974
      %v989 = vadd.f32 %v873, %v975
      %v990 = vadd.f32 %v874, %v976
      %v991 = vadd.f32 %v875, %v977
      %v992 = vld [vmem:[%s4] sm:$0x1]
      %v994 = vlaneseq
      %v995 = vshrl.u32 %v994, 7
      %v996 = vsub.s32 0, %v995
      %v997 = vrot.slane %v992, %v996
      %v999 = vadd.f32 %v978, %v997
      %v1000 = vadd.f32 %v979, %v997
      %v1001 = vadd.f32 %v980, %v997
      %v1002 = vadd.f32 %v981, %v997
      %v1003 = vadd.f32 %v982, %v997
      %v1004 = vadd.f32 %v983, %v997
      %v1005 = vadd.f32 %v984, %v997
      %v1006 = vadd.f32 %v985, %v997
      %v1007 = vadd.f32 %v986, %v997
      %v1008 = vadd.f32 %v987, %v997
      %v1009 = vadd.f32 %v988, %v997
      %v1010 = vadd.f32 %v989, %v997
      %v1011 = vadd.f32 %v990, %v997
      %v1012 = vadd.f32 %v991, %v997
      %v1013 = vmax.f32 %v999, 0.0
      %v1014 = vmax.f32 %v1000, 0.0
      %v1015 = vmax.f32 %v1001, 0.0
      %v1016 = vmax.f32 %v1002, 0.0
      %v1017 = vmax.f32 %v1003, 0.0
      %v1018 = vmax.f32 %v1004, 0.0
      %v1019 = vmax.f32 %v1005, 0.0
      %v1020 = vmax.f32 %v1006, 0.0
      %v1021 = vmax.f32 %v1007, 0.0
      %v1022 = vmax.f32 %v1008, 0.0
      %v1023 = vmax.f32 %v1009, 0.0
      %v1024 = vmax.f32 %v1010, 0.0
      %v1025 = vmax.f32 %v1011, 0.0
      %v1026 = vmax.f32 %v1012, 0.0
      %v1027 = vpack.c.bf16 %v1014, %v1013
      %v1028 = vpack.c.bf16 %v1016, %v1015
      %v1029 = vpack.c.bf16 %v1018, %v1017
      %v1030 = vpack.c.bf16 %v1020, %v1019
      %v1031 = vpack.c.bf16 %v1022, %v1021
      %v1032 = vpack.c.bf16 %v1024, %v1023
      %v1033 = vpack.c.bf16 %v1026, %v1025
      %1034 = vst [vmem:[#allocation2] sm:$0xff] %v1027
      %1035 = vst [vmem:[#allocation2 + $0x8] sm:$0xff] %v1028
      %1036 = vst [vmem:[#allocation2 + $0x10] sm:$0xff] %v1029
      %1037 = vst [vmem:[#allocation2 + $0x18] sm:$0xff] %v1030
      %1038 = vst [vmem:[#allocation2 + $0x20] sm:$0xff] %v1031
      %1039 = vst [vmem:[#allocation2 + $0x28] sm:$0xff] %v1032
      %1040 = vst [vmem:[#allocation2 + $0x30] sm:$0xff] %v1033
      %v1041 = vld [vmem:[#allocation2] sm:$0xff]
      %v1042 = vld [vmem:[#allocation2 + $0x8] sm:$0xff]
      %v1043 = vld [vmem:[#allocation2 + $0x10] sm:$0xff]
      %v1044 = vld [vmem:[#allocation2 + $0x18] sm:$0xff]
      %v1045 = vld [vmem:[#allocation2 + $0x20] sm:$0xff]
      %v1046 = vld [vmem:[#allocation2 + $0x28] sm:$0xff]
      %v1047 = vld [vmem:[#allocation2 + $0x30] sm:$0xff]
      %v1048 = vld [vmem:[%s5] sm:$0xf]
      %v1049 = vld [vmem:[%s5 + $0x4] sm:$0xf]
      %v1050 = vld [vmem:[%s5 + $0x8] sm:$0xf]
      %v1051 = vld [vmem:[%s5 + $0xc] sm:$0xf]
      %v1052 = vld [vmem:[%s5 + $0x10] sm:$0xf]
      %v1053 = vld [vmem:[%s5 + $0x14] sm:$0xf]
      %v1054 = vld [vmem:[%s5 + $0x18] sm:$0xf]
      %v1055 = vld [vmem:[%s5 + $0x1c] sm:$0xf]
      %v1056 = vld [vmem:[%s5 + $0x20] sm:$0xf]
      %v1057 = vld [vmem:[%s5 + $0x24] sm:$0xf]
      %v1058 = vld [vmem:[%s5 + $0x28] sm:$0xf]
      %v1059 = vld [vmem:[%s5 + $0x2c] sm:$0xf]
      %v1060 = vld [vmem:[%s5 + $0x30] sm:$0xf]
      %v1061 = vld [vmem:[%s5 + $0x34] sm:$0xf]
      %v1062 = vld [vmem:[%s5 + $0x38] sm:$0xf]
      %v1063 = vld [vmem:[%s5 + $0x3c] sm:$0xf]
      %v1064 = vld [vmem:[%s6] sm:$0x1]
      %v1066 = vlaneseq
      %v1067 = vshrl.u32 %v1066, 7
      %v1068 = vsub.s32 0, %v1067
      %v1069 = vrot.slane %v1064, %v1068
      %v1087 = vunpack.c.l.b16 %v1048
      %v1088 = vunpack.c.l.b16 %v1049
      %v1089 = vunpack.c.l.b16 %v1050
      %v1090 = vunpack.c.l.b16 %v1051
      %v1091 = vunpack.c.l.b16 %v1052
      %v1092 = vunpack.c.l.b16 %v1053
      %v1093 = vunpack.c.l.b16 %v1054
      %v1094 = vunpack.c.l.b16 %v1055
      %v1095 = vunpack.c.l.b16 %v1056
      %v1096 = vunpack.c.l.b16 %v1057
      %v1097 = vunpack.c.l.b16 %v1058
      %v1098 = vunpack.c.l.b16 %v1059
      %v1099 = vunpack.c.l.b16 %v1060
      %v1100 = vunpack.c.l.b16 %v1061
      %v1101 = vunpack.c.l.b16 %v1062
      %v1102 = vunpack.c.l.b16 %v1063
      %v1103 = vpack.c.b16 %v1088, %v1087
      %v1104 = vpack.c.b16 %v1090, %v1089
      %v1105 = vpack.c.b16 %v1092, %v1091
      %v1106 = vpack.c.b16 %v1094, %v1093
      %v1107 = vpack.c.b16 %v1096, %v1095
      %v1108 = vpack.c.b16 %v1098, %v1097
      %v1109 = vpack.c.b16 %v1100, %v1099
      %v1110 = vpack.c.b16 %v1102, %v1101
      %1119 = vmatprep.subr.bf16.mxu0 0
      %1120 = vmatpush1.bf16.msra.mxu0 %v1103
      %1121 = vmatprep.subr.bf16.mxu0 0
      %1122 = vmatpush1.bf16.msra.mxu0 %v1104
      %1123 = vmatprep.subr.bf16.mxu0 0
      %1124 = vmatpush1.bf16.msra.mxu0 %v1105
      %1125 = vmatprep.subr.bf16.mxu0 0
      %1126 = vmatpush1.bf16.msra.mxu0 %v1106
      %1127 = vmatprep.subr.bf16.mxu0 0
      %1128 = vmatpush1.bf16.msra.mxu0 %v1107
      %1129 = vmatprep.subr.bf16.mxu0 0
      %1130 = vmatpush1.bf16.msra.mxu0 %v1108
      %1131 = vmatprep.subr.bf16.mxu0 0
      %1132 = vmatpush1.bf16.msra.mxu0 %v1109
      %1133 = vmatprep.subr.bf16.mxu0 0
      %1134 = vmatpush1.bf16.msra.mxu0 %v1110
      %1135 = vmatprep.subr.bf16.mxu0 0
      %1136 = vmatpush1.bf16.msra.mxu0 0
      %1137 = vmatprep.subr.bf16.mxu0 0
      %1138 = vmatpush1.bf16.msra.mxu0 0
      %1139 = vmatprep.subr.bf16.mxu0 0
      %1140 = vmatpush1.bf16.msra.mxu0 0
      %1141 = vmatprep.subr.bf16.mxu0 0
      %1142 = vmatpush1.bf16.msra.mxu0 0
      %1143 = vmatprep.subr.bf16.mxu0 0
      %1144 = vmatpush1.bf16.msra.mxu0 0
      %1145 = vmatprep.subr.bf16.mxu0 0
      %1146 = vmatpush1.bf16.msra.mxu0 0
      %1147 = vmatprep.subr.bf16.mxu0 0
      %1148 = vmatpush1.bf16.msra.mxu0 0
      %1149 = vmatprep.subr.bf16.mxu0 0
      %1150 = vmatpush1.bf16.msra.mxu0 0
      %1151 = vmatprep.mubr.bf16.mxu0 0
      %1152 = vmatmul.mubr.bf16.gmra.mrb[0].mxu0 %v1041
      %v1153 = vpop.f32.mrb[0].mxu0
      %v1154 = vadd.f32 %v1069, %v1153
      %v1155 = vpop.f32.mrb[0].mxu0
      %v1156 = vpop.f32.mrb[0].mxu0
      %v1157 = vadd.f32 %v1069, %v1156
      %v1158 = vpop.f32.mrb[0].mxu0
      %1159 = vmatprep.mubr.bf16.mxu0 0
      %1160 = vmatmul.mubr.bf16.gmra.mrb[0].mxu0 %v1042
      %v1161 = vpop.f32.mrb[0].mxu0
      %v1162 = vadd.f32 %v1069, %v1161
      %v1163 = vpop.f32.mrb[0].mxu0
      %v1164 = vpop.f32.mrb[0].mxu0
      %v1165 = vadd.f32 %v1069, %v1164
      %v1166 = vpop.f32.mrb[0].mxu0
      %1167 = vmatprep.mubr.bf16.mxu0 0
      %1168 = vmatmul.mubr.bf16.gmra.mrb[0].mxu0 %v1043
      %v1169 = vpop.f32.mrb[0].mxu0
      %v1170 = vadd.f32 %v1069, %v1169
      %v1171 = vpop.f32.mrb[0].mxu0
      %v1172 = vpop.f32.mrb[0].mxu0
      %v1173 = vadd.f32 %v1069, %v1172
      %v1174 = vpop.f32.mrb[0].mxu0
      %1175 = vmatprep.mubr.bf16.mxu0 0
      %1176 = vmatmul.mubr.bf16.gmra.mrb[0].mxu0 %v1044
      %v1177 = vpop.f32.mrb[0].mxu0
      %v1178 = vadd.f32 %v1069, %v1177
      %v1179 = vpop.f32.mrb[0].mxu0
      %v1180 = vpop.f32.mrb[0].mxu0
      %v1181 = vadd.f32 %v1069, %v1180
      %v1182 = vpop.f32.mrb[0].mxu0
      %1183 = vmatprep.mubr.bf16.mxu0 0
      %1184 = vmatmul.mubr.bf16.gmra.mrb[0].mxu0 %v1045
      %v1185 = vpop.f32.mrb[0].mxu0
      %v1186 = vadd.f32 %v1069, %v1185
      %v1187 = vpop.f32.mrb[0].mxu0
      %v1188 = vpop.f32.mrb[0].mxu0
      %v1189 = vadd.f32 %v1069, %v1188
      %v1190 = vpop.f32.mrb[0].mxu0
      %1191 = vmatprep.mubr.bf16.mxu0 0
      %1192 = vmatmul.mubr.bf16.gmra.mrb[0].mxu0 %v1046
      %v1193 = vpop.f32.mrb[0].mxu0
      %v1194 = vadd.f32 %v1069, %v1193
      %v1195 = vpop.f32.mrb[0].mxu0
      %v1196 = vpop.f32.mrb[0].mxu0
      %v1197 = vadd.f32 %v1069, %v1196
      %v1198 = vpop.f32.mrb[0].mxu0
      %1199 = vmatprep.mubr.bf16.mxu0 0
      %1200 = vmatmul.mubr.bf16.gmra.mrb[0].mxu0 %v1047
      %v1201 = vpop.f32.mrb[0].mxu0
      %v1202 = vadd.f32 %v1069, %v1201
      %v1203 = vpop.f32.mrb[0].mxu0
      %v1204 = vpop.f32.mrb[0].mxu0
      %v1205 = vadd.f32 %v1069, %v1204
      %v1206 = vpop.f32.mrb[0].mxu0
      %1207 = vdwg.mxu0
      %v1208 = vmax.f32 %v1154, 0.0
      %v1209 = vmax.f32 %v1157, 0.0
      %v1210 = vmax.f32 %v1162, 0.0
      %v1211 = vmax.f32 %v1165, 0.0
      %v1212 = vmax.f32 %v1170, 0.0
      %v1213 = vmax.f32 %v1173, 0.0
      %v1214 = vmax.f32 %v1178, 0.0
      %v1215 = vmax.f32 %v1181, 0.0
      %v1216 = vmax.f32 %v1186, 0.0
      %v1217 = vmax.f32 %v1189, 0.0
      %v1218 = vmax.f32 %v1194, 0.0
      %v1219 = vmax.f32 %v1197, 0.0
      %v1220 = vmax.f32 %v1202, 0.0
      %v1221 = vmax.f32 %v1205, 0.0
      %v1222 = vpack.c.bf16 %v1209, %v1208
      %v1223 = vpack.c.bf16 %v1211, %v1210
      %v1224 = vpack.c.bf16 %v1213, %v1212
      %v1225 = vpack.c.bf16 %v1215, %v1214
      %v1226 = vpack.c.bf16 %v1217, %v1216
      %v1227 = vpack.c.bf16 %v1219, %v1218
      %v1228 = vpack.c.bf16 %v1221, %v1220
      %1229 = vst [vmem:[#allocation3] sm:$0xff] %v1222
      %1230 = vst [vmem:[#allocation3 + $0x8] sm:$0xff] %v1223
      %1231 = vst [vmem:[#allocation3 + $0x10] sm:$0xff] %v1224
      %1232 = vst [vmem:[#allocation3 + $0x18] sm:$0xff] %v1225
      %1233 = vst [vmem:[#allocation3 + $0x20] sm:$0xff] %v1226
      %1234 = vst [vmem:[#allocation3 + $0x28] sm:$0xff] %v1227
      %1235 = vst [vmem:[#allocation3 + $0x30] sm:$0xff] %v1228
      %v1236 = vld [vmem:[#allocation3] sm:$0xff]
      %v1237 = vld [vmem:[#allocation3 + $0x8] sm:$0xff]
      %v1238 = vld [vmem:[#allocation3 + $0x10] sm:$0xff]
      %v1239 = vld [vmem:[#allocation3 + $0x18] sm:$0xff]
      %v1240 = vld [vmem:[#allocation3 + $0x20] sm:$0xff]
      %v1241 = vld [vmem:[#allocation3 + $0x28] sm:$0xff]
      %v1242 = vld [vmem:[#allocation3 + $0x30] sm:$0xff]
      %v1243 = vld [vmem:[%s7] sm:$0xf]
      %v1244 = vld [vmem:[%s7 + $0x4] sm:$0xf]
      %v1245 = vld [vmem:[%s7 + $0x8] sm:$0xf]
      %v1246 = vld [vmem:[%s7 + $0xc] sm:$0xf]
      %v1247 = vld [vmem:[%s7 + $0x10] sm:$0xf]
      %v1248 = vld [vmem:[%s7 + $0x14] sm:$0xf]
      %v1249 = vld [vmem:[%s7 + $0x18] sm:$0xf]
      %v1250 = vld [vmem:[%s7 + $0x1c] sm:$0xf]
      %v1251 = vld [vmem:[%s7 + $0x20] sm:$0xf]
      %v1252 = vld [vmem:[%s7 + $0x24] sm:$0xf]
      %v1253 = vld [vmem:[%s7 + $0x28] sm:$0xf]
      %v1254 = vld [vmem:[%s7 + $0x2c] sm:$0xf]
      %v1255 = vld [vmem:[%s7 + $0x30] sm:$0xf]
      %v1256 = vld [vmem:[%s7 + $0x34] sm:$0xf]
      %v1257 = vld [vmem:[%s7 + $0x38] sm:$0xf]
      %v1258 = vld [vmem:[%s7 + $0x3c] sm:$0xf]
      %v1259 = vld [vmem:[%s8] sm:$0x1]
      %v1261 = vlaneseq
      %v1262 = vshrl.u32 %v1261, 7
      %v1263 = vsub.s32 0, %v1262
      %v1264 = vrot.slane %v1259, %v1263
      %v1282 = vunpack.c.l.b16 %v1243
      %v1283 = vunpack.c.l.b16 %v1244
      %v1284 = vunpack.c.l.b16 %v1245
      %v1285 = vunpack.c.l.b16 %v1246
      %v1286 = vunpack.c.l.b16 %v1247
      %v1287 = vunpack.c.l.b16 %v1248
      %v1288 = vunpack.c.l.b16 %v1249
      %v1289 = vunpack.c.l.b16 %v1250
      %v1290 = vunpack.c.l.b16 %v1251
      %v1291 = vunpack.c.l.b16 %v1252
      %v1292 = vunpack.c.l.b16 %v1253
      %v1293 = vunpack.c.l.b16 %v1254
      %v1294 = vunpack.c.l.b16 %v1255
      %v1295 = vunpack.c.l.b16 %v1256
      %v1296 = vunpack.c.l.b16 %v1257
      %v1297 = vunpack.c.l.b16 %v1258
      %v1298 = vpack.c.b16 %v1283, %v1282
      %v1299 = vpack.c.b16 %v1285, %v1284
      %v1300 = vpack.c.b16 %v1287, %v1286
      %v1301 = vpack.c.b16 %v1289, %v1288
      %v1302 = vpack.c.b16 %v1291, %v1290
      %v1303 = vpack.c.b16 %v1293, %v1292
      %v1304 = vpack.c.b16 %v1295, %v1294
      %v1305 = vpack.c.b16 %v1297, %v1296
      %1314 = vmatprep.subr.bf16.mxu0 0
      %1315 = vmatpush1.bf16.msra.mxu0 %v1298
      %1316 = vmatprep.subr.bf16.mxu0 0
      %1317 = vmatpush1.bf16.msra.mxu0 %v1299
      %1318 = vmatprep.subr.bf16.mxu0 0
      %1319 = vmatpush1.bf16.msra.mxu0 %v1300
      %1320 = vmatprep.subr.bf16.mxu0 0
      %1321 = vmatpush1.bf16.msra.mxu0 %v1301
      %1322 = vmatprep.subr.bf16.mxu0 0
      %1323 = vmatpush1.bf16.msra.mxu0 %v1302
      %1324 = vmatprep.subr.bf16.mxu0 0
      %1325 = vmatpush1.bf16.msra.mxu0 %v1303
      %1326 = vmatprep.subr.bf16.mxu0 0
      %1327 = vmatpush1.bf16.msra.mxu0 %v1304
      %1328 = vmatprep.subr.bf16.mxu0 0
      %1329 = vmatpush1.bf16.msra.mxu0 %v1305
      %1330 = vmatprep.subr.bf16.mxu0 0
      %1331 = vmatpush1.bf16.msra.mxu0 0
      %1332 = vmatprep.subr.bf16.mxu0 0
      %1333 = vmatpush1.bf16.msra.mxu0 0
      %1334 = vmatprep.subr.bf16.mxu0 0
      %1335 = vmatpush1.bf16.msra.mxu0 0
      %1336 = vmatprep.subr.bf16.mxu0 0
      %1337 = vmatpush1.bf16.msra.mxu0 0
      %1338 = vmatprep.subr.bf16.mxu0 0
      %1339 = vmatpush1.bf16.msra.mxu0 0
      %1340 = vmatprep.subr.bf16.mxu0 0
      %1341 = vmatpush1.bf16.msra.mxu0 0
      %1342 = vmatprep.subr.bf16.mxu0 0
      %1343 = vmatpush1.bf16.msra.mxu0 0
      %1344 = vmatprep.subr.bf16.mxu0 0
      %1345 = vmatpush1.bf16.msra.mxu0 0
      %1346 = vmatprep.mubr.bf16.mxu0 0
      %1347 = vmatmul.mubr.bf16.gmra.mrb[0].mxu0 %v1236
      %v1348 = vpop.f32.mrb[0].mxu0
      %v1349 = vadd.f32 %v1264, %v1348
      %v1350 = vpop.f32.mrb[0].mxu0
      %v1351 = vpop.f32.mrb[0].mxu0
      %v1352 = vadd.f32 %v1264, %v1351
      %v1353 = vpop.f32.mrb[0].mxu0
      %1354 = vmatprep.mubr.bf16.mxu0 0
      %1355 = vmatmul.mubr.bf16.gmra.mrb[0].mxu0 %v1237
      %v1356 = vpop.f32.mrb[0].mxu0
      %v1357 = vadd.f32 %v1264, %v1356
      %v1358 = vpop.f32.mrb[0].mxu0
      %v1359 = vpop.f32.mrb[0].mxu0
      %v1360 = vadd.f32 %v1264, %v1359
      %v1361 = vpop.f32.mrb[0].mxu0
      %1362 = vmatprep.mubr.bf16.mxu0 0
      %1363 = vmatmul.mubr.bf16.gmra.mrb[0].mxu0 %v1238
      %v1364 = vpop.f32.mrb[0].mxu0
      %v1365 = vadd.f32 %v1264, %v1364
      %v1366 = vpop.f32.mrb[0].mxu0
      %v1367 = vpop.f32.mrb[0].mxu0
      %v1368 = vadd.f32 %v1264, %v1367
      %v1369 = vpop.f32.mrb[0].mxu0
      %1370 = vmatprep.mubr.bf16.mxu0 0
      %1371 = vmatmul.mubr.bf16.gmra.mrb[0].mxu0 %v1239
      %v1372 = vpop.f32.mrb[0].mxu0
      %v1373 = vadd.f32 %v1264, %v1372
      %v1374 = vpop.f32.mrb[0].mxu0
      %v1375 = vpop.f32.mrb[0].mxu0
      %v1376 = vadd.f32 %v1264, %v1375
      %v1377 = vpop.f32.mrb[0].mxu0
      %1378 = vmatprep.mubr.bf16.mxu0 0
      %1379 = vmatmul.mubr.bf16.gmra.mrb[0].mxu0 %v1240
      %v1380 = vpop.f32.mrb[0].mxu0
      %v1381 = vadd.f32 %v1264, %v1380
      %v1382 = vpop.f32.mrb[0].mxu0
      %v1383 = vpop.f32.mrb[0].mxu0
      %v1384 = vadd.f32 %v1264, %v1383
      %v1385 = vpop.f32.mrb[0].mxu0
      %1386 = vmatprep.mubr.bf16.mxu0 0
      %1387 = vmatmul.mubr.bf16.gmra.mrb[0].mxu0 %v1241
      %v1388 = vpop.f32.mrb[0].mxu0
      %v1389 = vadd.f32 %v1264, %v1388
      %v1390 = vpop.f32.mrb[0].mxu0
      %v1391 = vpop.f32.mrb[0].mxu0
      %v1392 = vadd.f32 %v1264, %v1391
      %v1393 = vpop.f32.mrb[0].mxu0
      %1394 = vmatprep.mubr.bf16.mxu0 0
      %1395 = vmatmul.mubr.bf16.gmra.mrb[0].mxu0 %v1242
      %v1396 = vpop.f32.mrb[0].mxu0
      %v1397 = vadd.f32 %v1264, %v1396
      %v1398 = vpop.f32.mrb[0].mxu0
      %v1399 = vpop.f32.mrb[0].mxu0
      %v1400 = vadd.f32 %v1264, %v1399
      %v1401 = vpop.f32.mrb[0].mxu0
      %1402 = vdwg.mxu0
      %vm1403 = vcmask 31744
      %1404 = vst.msk [vmem:[%s356] sm:$0xff] %vm1403, %v1349
      %1405 = vst.msk [vmem:[%s356 + $0x8] sm:$0xff] %vm1403, %v1352
      %1406 = vst.msk [vmem:[%s356 + $0x10] sm:$0xff] %vm1403, %v1357
      %1407 = vst.msk [vmem:[%s356 + $0x18] sm:$0xff] %vm1403, %v1360
      %1408 = vst.msk [vmem:[%s356 + $0x20] sm:$0xff] %vm1403, %v1365
      %1409 = vst.msk [vmem:[%s356 + $0x28] sm:$0xff] %vm1403, %v1368
      %1410 = vst.msk [vmem:[%s356 + $0x30] sm:$0xff] %vm1403, %v1373
      %1411 = vst.msk [vmem:[%s356 + $0x38] sm:$0xff] %vm1403, %v1376
      %1412 = vst.msk [vmem:[%s356 + $0x40] sm:$0xff] %vm1403, %v1381
      %1413 = vst.msk [vmem:[%s356 + $0x48] sm:$0xff] %vm1403, %v1384
      %1414 = vst.msk [vmem:[%s356 + $0x50] sm:$0xff] %vm1403, %v1389
      %1415 = vst.msk [vmem:[%s356 + $0x58] sm:$0xff] %vm1403, %v1392
      %1416 = vst.msk [vmem:[%s356 + $0x60] sm:$0xff] %vm1403, %v1397
      %1417 = vst.msk [vmem:[%s356 + $0x68] sm:$0xff] %vm1403, %v1400
      %s1418 = smul.u32 14, %s20
      %p1419 = scmp.lt.s32.totalorder %s1418, 27
      %s1420 = scalar_select %p1419, %s1418, 27
      %s1421 = smul.addr %s1420, 8
      %s1422 = scalar_lea.vmem %s9, %s1421
      // Predicated region
      $region57: #{conditional_critic_forward.1} parent=55 // pred_check
        %p1423 = pneg %p237
      $region58: #{conditional_critic_forward.1} parent=55 // pred_check_branch
        %1425 = sbr.rel (%p1423) target = $region60
      $region59: #{conditional_critic_forward.1} parent=55 // pred_region
        %s1426 = smul.u32 14, %s20
      $region60: #{conditional_critic_forward.1} parent=55 // pred_fallthru
        _
    $region56: #{conditional_critic_forward.1} parent=5 // pred_fallthru
      _
    %p1427 = scmp.le.s32.totalorder 2, %s15
    // Predicated region
    $region61: #{conditional_critic_forward.1} parent=5 // pred_check
      %p1428 = pneg %p1427
    $region62: #{conditional_critic_forward.1} parent=5 // pred_check_branch
      %1430 = sbr.rel (%p1428) target = $region64
    $region63: #{conditional_critic_forward.1} parent=5 // pred_region
      %s1431 = ssub.s32 %s15, 2
      // Predicated region
      $region65: #{conditional_critic_forward.1} parent=63 // pred_check
        %p1432 = pneg %p243
      $region66: #{conditional_critic_forward.1} parent=63 // pred_check_branch
        %1434 = sbr.rel (%p1432) target = $region68
      $region67: #{conditional_critic_forward.1} parent=63 // pred_region
        %s1435 = smul.u32 14, %s21
        %p1436 = scmp.lt.s32.totalorder %s1435, 27
        %s1437 = scalar_select %p1436, %s1435, 27
        %s1438 = smul.addr %s1437, 8
        %s1439 = scalar_lea.vmem %s9, %s1438
      $region68: #{conditional_critic_forward.1} parent=63 // pred_fallthru
        _
    $region64: #{conditional_critic_forward.1} parent=5 // pred_fallthru
      _
  $region6: #{conditional_critic_forward.1} parent=0 // loop_footer
    %s19 = sadd.s32 1, %s15
  $region7: #{conditional_critic_forward.1} parent=0 // loop_footer_branch
    %14 = sbr.rel target = $region3
  $region8: #{conditional_critic_forward.1} parent=0 // loop_exit
    _

</llo_original>
